<compile_context>
chip_gen: v7x
topology: tpu7x:2x2x1
jax: 0.10.0
libtpu: 0.0.40
codegen_flags: <defaults>
</compile_context>

<pallas_src>
import jax
import jax.numpy as jnp
from jax import lax
from jax.experimental import pallas as pl
from jax.experimental.pallas import tpu as pltpu


def _lstm_fused_kernel(x_ref, wih_ref, whh_ref, bih_ref, bhh_ref,
                       wfc_ref, bfc_ref, out_ref):
    """Fused LSTM (last hidden state) + Linear forward.

    x_ref:   (I_pad, T*B)  time-major columns (col = t*B + b) of the inputs.
    wih_ref: (4H, I_pad)   input->gates weights (PyTorch gate order i, f, g, o).
    whh_ref: (4H, H)       hidden->gates weights.
    bih_ref/bhh_ref: (4H, 1) biases.
    wfc_ref: (H, O)        final Linear weight, pre-transposed.
    bfc_ref: (1, O)        final Linear bias.
    out_ref: (B, O)        output.
    """
    H4 = wih_ref.shape[0]
    H = H4 // 4
    B, _ = out_ref.shape
    TB = x_ref.shape[1]
    T = TB // B
    f32 = jnp.float32

    # ---- One-time, loop-invariant setup (all off the serial h-chain). ------
    # sigmoid(z) = 0.5 * tanh(z / 2) + 0.5 : fold the 1/2 into the i/f/o gate
    # rows of the weights/bias ONCE, so each step needs only a single
    # full-width tanh over all four gates plus one full-width FMA.
    row = lax.broadcasted_iota(jnp.int32, (H4, 1), 0)
    is_g = jnp.logical_and(row >= 2 * H, row < 3 * H)
    gate_scale = jnp.where(is_g, f32(1.0), f32(0.5))       # (4H, 1) pre & post scale
    gate_off = jnp.where(is_g, f32(0.0), f32(0.5))         # (4H, 1) post offset

    wih_s = wih_ref[...] * gate_scale                       # (4H, I_pad)
    whh_s = whh_ref[...] * gate_scale                       # (4H, H)
    b_s = (bih_ref[...] + bhh_ref[...]) * gate_scale        # (4H, 1)

    # Input projection for ALL timesteps as one MXU matmul, hoisted out of the
    # recurrence (4H = 128 fills the MXU rows; default f32 precision).
    xw_all = jnp.dot(wih_s, x_ref[...],
                     preferred_element_type=f32) + b_s      # (4H, T*B)

    # ---- Recurrence in (4H, B) / (H, B) orientation. ------------------------
    h = jnp.zeros((H, B), f32)
    c = jnp.zeros((H, B), f32)

    # T is small and static: full unroll so the scheduler overlaps the
    # off-chain work (xw slices) under the per-step matmul latency.
    for t in range(T):
        gates = xw_all[:, t * B:(t + 1) * B] + jnp.dot(
            whh_s, h, preferred_element_type=f32)           # (4H, B)
        # One EUP pass over all four gates + one full-width FMA.
        tg = jnp.tanh(gates) * gate_scale + gate_off
        i_g = tg[0 * H:1 * H]                                # sublane-aligned slices
        f_g = tg[1 * H:2 * H]
        g_g = tg[2 * H:3 * H]
        o_g = tg[3 * H:4 * H]
        c = f_g * c + i_g * g_g
        h = o_g * jnp.tanh(c)

    # Final Linear on the last hidden state: contract H on both operands
    # (h is carried as (H, B)) -> (B, O), no explicit transposes needed.
    out = lax.dot_general(h, wfc_ref[...], (((0,), (0,)), ((), ())),
                          preferred_element_type=f32)
    out_ref[...] = (out + bfc_ref[...]).astype(out_ref.dtype)


def _round_up(n, m):
    return ((n + m - 1) // m) * m


@jax.jit
def lstm_timeseries_forward(x, params):
    """x: (B, T, I) float32.  Returns (B, O) float32."""
    w_ih, w_hh, b_ih, b_hh, w_fc, b_fc = (
        params["w_ih"], params["w_hh"], params["b_ih"], params["b_hh"],
        params["w_fc"], params["b_fc"])
    B, T, I = x.shape
    H4 = w_ih.shape[0]
    O = w_fc.shape[0]

    # Time-major, feature-leading layout so the in-kernel projection and the
    # per-step (4H, B) slices need no in-kernel transposes.  Pad the (tiny)
    # contraction dim I to a sublane multiple for a clean MXU tile.
    I_pad = _round_up(max(I, 8), 8)
    x_tm = jnp.transpose(x, (2, 1, 0)).reshape(I, T * B)     # (I, T*B), col = t*B + b
    x_tm = jnp.pad(x_tm, ((0, I_pad - I), (0, 0)))
    w_ih_p = jnp.pad(w_ih, ((0, 0), (0, I_pad - I)))

    vmem = pl.BlockSpec(memory_space=pltpu.MemorySpace.VMEM)
    out = pl.pallas_call(
        _lstm_fused_kernel,
        out_shape=jax.ShapeDtypeStruct((B, O), jnp.float32),
        in_specs=[vmem] * 7,
        out_specs=vmem,
    )(x_tm, w_ih_p, w_hh,
      b_ih.reshape(H4, 1), b_hh.reshape(H4, 1),
      w_fc.T, b_fc.reshape(1, O))
    return out


def _reference_forward(x, params):
    """Pure-JAX reference (lax.scan) mirroring nn.LSTM + nn.Linear."""
    w_ih, w_hh, b_ih, b_hh, w_fc, b_fc = (
        params["w_ih"], params["w_hh"], params["b_ih"], params["b_hh"],
        params["w_fc"], params["b_fc"])
    B = x.shape[0]
    H = w_hh.shape[1]
    hp = jax.lax.Precision.HIGHEST

    def step(carry, x_t):
        h, c = carry
        gates = (jnp.dot(x_t, w_ih.T, precision=hp)
                 + jnp.dot(h, w_hh.T, precision=hp) + b_ih + b_hh)
        i, f, g, o = jnp.split(gates, 4, axis=-1)
        i, f, o = jax.nn.sigmoid(i), jax.nn.sigmoid(f), jax.nn.sigmoid(o)
        g = jnp.tanh(g)
        c = f * c + i * g
        h = o * jnp.tanh(c)
        return (h, c), None

    h0 = jnp.zeros((B, H), jnp.float32)
    c0 = jnp.zeros((B, H), jnp.float32)
    (h_last, _), _ = jax.lax.scan(step, (h0, c0), jnp.transpose(x, (1, 0, 2)))
    return jnp.dot(h_last, w_fc.T, precision=hp) + b_fc


def init_params(key, input_size, hidden_size, output_size):
    """Deterministic synthetic init (uniform(-1/sqrt(H), 1/sqrt(H)) like PyTorch)."""
    ks = jax.random.split(key, 6)
    bound = 1.0 / jnp.sqrt(jnp.float32(hidden_size))
    u = lambda k, shape: jax.random.uniform(k, shape, jnp.float32, -bound, bound)
    return {
        "w_ih": u(ks[0], (4 * hidden_size, input_size)),
        "w_hh": u(ks[1], (4 * hidden_size, hidden_size)),
        "b_ih": u(ks[2], (4 * hidden_size,)),
        "b_hh": u(ks[3], (4 * hidden_size,)),
        "w_fc": u(ks[4], (output_size, hidden_size)),
        "b_fc": u(ks[5], (output_size,)),
    }


if __name__ == "__main__":
    B, T, I, H, O = 2, 8, 4, 32, 3

    key = jax.random.PRNGKey(0)
    k_x, k_p = jax.random.split(key)
    x = jax.random.normal(k_x, (B, T, I), jnp.float32)
    params = init_params(k_p, I, H, O)

    out = lstm_timeseries_forward(x, params)
    out = jax.block_until_ready(out)

    ref = _reference_forward(x, params)
    assert out.shape == (B, O)
    assert jnp.allclose(out, ref, atol=5e-4, rtol=5e-4), (out, ref)

    print("KERNEL_OK")
</pallas_src>

<mosaic_0001>
module attributes {stable_mosaic.version = 11 : i64} {
  func.func @_lstm_fused_kernel(%arg0: memref<8x16xf32, #tpu.memory_space<vmem>>, %arg1: memref<128x8xf32, #tpu.memory_space<vmem>>, %arg2: memref<128x32xf32, #tpu.memory_space<vmem>>, %arg3: memref<128x1xf32, #tpu.memory_space<vmem>>, %arg4: memref<128x1xf32, #tpu.memory_space<vmem>>, %arg5: memref<32x3xf32, #tpu.memory_space<vmem>>, %arg6: memref<1x3xf32, #tpu.memory_space<vmem>>, %arg7: memref<2x3xf32, #tpu.memory_space<vmem>>) attributes {dimension_semantics = [], scalar_prefetch = 0 : i64, scratch_operands = 0 : i64, tpu.core_type = #tpu.core_type<tc>} {
    %0 = tpu.iota {dimensions = array<i32: 0>} : vector<128x1xi32>
    %c64_i32 = arith.constant 64 : i32
    %1 = vector.broadcast %c64_i32 : i32 to vector<128x1xi32>
    %2 = arith.cmpi sge, %0, %1 : vector<128x1xi32>
    %c96_i32 = arith.constant 96 : i32
    %3 = vector.broadcast %c96_i32 : i32 to vector<128x1xi32>
    %4 = arith.cmpi slt, %0, %3 : vector<128x1xi32>
    %5 = arith.andi %2, %4 : vector<128x1xi1>
    %cst = arith.constant 1.000000e+00 : f32
    %cst_0 = arith.constant 5.000000e-01 : f32
    %6 = vector.broadcast %cst : f32 to vector<128x1xf32>
    %7 = vector.broadcast %cst_0 : f32 to vector<128x1xf32>
    %8 = arith.select %5, %6, %7 : vector<128x1xi1>, vector<128x1xf32>
    %cst_1 = arith.constant 0.000000e+00 : f32
    %cst_2 = arith.constant 5.000000e-01 : f32
    %9 = vector.broadcast %cst_1 : f32 to vector<128x1xf32>
    %10 = vector.broadcast %cst_2 : f32 to vector<128x1xf32>
    %11 = arith.select %5, %9, %10 : vector<128x1xi1>, vector<128x1xf32>
    %c0 = arith.constant 0 : index
    %c0_3 = arith.constant 0 : index
    %12 = vector.load %arg1[%c0, %c0_3] : memref<128x8xf32, #tpu.memory_space<vmem>>, vector<128x8xf32>
    %13 = vector.broadcast %8 : vector<128x1xf32> to vector<128x8xf32>
    %14 = arith.mulf %12, %13 : vector<128x8xf32>
    %c0_4 = arith.constant 0 : index
    %c0_5 = arith.constant 0 : index
    %15 = vector.load %arg2[%c0_4, %c0_5] : memref<128x32xf32, #tpu.memory_space<vmem>>, vector<128x32xf32>
    %16 = vector.broadcast %8 : vector<128x1xf32> to vector<128x32xf32>
    %17 = arith.mulf %15, %16 : vector<128x32xf32>
    %c0_6 = arith.constant 0 : index
    %c0_7 = arith.constant 0 : index
    %18 = vector.load %arg3[%c0_6, %c0_7] : memref<128x1xf32, #tpu.memory_space<vmem>>, vector<128x1xf32>
    %c0_8 = arith.constant 0 : index
    %c0_9 = arith.constant 0 : index
    %19 = vector.load %arg4[%c0_8, %c0_9] : memref<128x1xf32, #tpu.memory_space<vmem>>, vector<128x1xf32>
    %20 = arith.addf %18, %19 : vector<128x1xf32>
    %21 = arith.mulf %20, %8 : vector<128x1xf32>
    %c0_10 = arith.constant 0 : index
    %c0_11 = arith.constant 0 : index
    %22 = vector.load %arg0[%c0_10, %c0_11] : memref<8x16xf32, #tpu.memory_space<vmem>>, vector<8x16xf32>
    %cst_12 = arith.constant dense<0.000000e+00> : vector<128x16xf32>
    %23 = tpu.matmul %14, %22, %cst_12 {dimension_numbers = #tpu.dot_dimension_numbers<[1], [0], [0], [1], [0, 0, 1, 1], [], []>} : vector<128x8xf32>, vector<8x16xf32>, vector<128x16xf32> -> vector<128x16xf32>
    %24 = vector.broadcast %21 : vector<128x1xf32> to vector<128x16xf32>
    %25 = arith.addf %23, %24 : vector<128x16xf32>
    %cst_13 = arith.constant 0.000000e+00 : f32
    %26 = vector.broadcast %cst_13 : f32 to vector<32x2xf32>
    %cst_14 = arith.constant 0.000000e+00 : f32
    %27 = vector.broadcast %cst_14 : f32 to vector<32x2xf32>
    %28 = vector.extract_strided_slice %25 {offsets = [0, 0], sizes = [128, 2], strides = [1, 1]} : vector<128x16xf32> to vector<128x2xf32>
    %cst_15 = arith.constant dense<0.000000e+00> : vector<128x2xf32>
    %29 = tpu.matmul %17, %26, %cst_15 {dimension_numbers = #tpu.dot_dimension_numbers<[1], [0], [0], [1], [0, 0, 1, 1], [], []>} : vector<128x32xf32>, vector<32x2xf32>, vector<128x2xf32> -> vector<128x2xf32>
    %30 = arith.addf %28, %29 : vector<128x2xf32>
    %31 = math.tanh %30 : vector<128x2xf32>
    %32 = vector.broadcast %8 : vector<128x1xf32> to vector<128x2xf32>
    %33 = arith.mulf %31, %32 : vector<128x2xf32>
    %34 = vector.broadcast %11 : vector<128x1xf32> to vector<128x2xf32>
    %35 = arith.addf %33, %34 : vector<128x2xf32>
    %36 = vector.extract_strided_slice %35 {offsets = [0, 0], sizes = [32, 2], strides = [1, 1]} : vector<128x2xf32> to vector<32x2xf32>
    %37 = vector.extract_strided_slice %35 {offsets = [32, 0], sizes = [32, 2], strides = [1, 1]} : vector<128x2xf32> to vector<32x2xf32>
    %38 = vector.extract_strided_slice %35 {offsets = [64, 0], sizes = [32, 2], strides = [1, 1]} : vector<128x2xf32> to vector<32x2xf32>
    %39 = vector.extract_strided_slice %35 {offsets = [96, 0], sizes = [32, 2], strides = [1, 1]} : vector<128x2xf32> to vector<32x2xf32>
    %40 = arith.mulf %37, %27 : vector<32x2xf32>
    %41 = arith.mulf %36, %38 : vector<32x2xf32>
    %42 = arith.addf %40, %41 : vector<32x2xf32>
    %43 = math.tanh %42 : vector<32x2xf32>
    %44 = arith.mulf %39, %43 : vector<32x2xf32>
    %45 = vector.extract_strided_slice %25 {offsets = [0, 2], sizes = [128, 2], strides = [1, 1]} : vector<128x16xf32> to vector<128x2xf32>
    %cst_16 = arith.constant dense<0.000000e+00> : vector<128x2xf32>
    %46 = tpu.matmul %17, %44, %cst_16 {dimension_numbers = #tpu.dot_dimension_numbers<[1], [0], [0], [1], [0, 0, 1, 1], [], []>} : vector<128x32xf32>, vector<32x2xf32>, vector<128x2xf32> -> vector<128x2xf32>
    %47 = arith.addf %45, %46 : vector<128x2xf32>
    %48 = math.tanh %47 : vector<128x2xf32>
    %49 = vector.broadcast %8 : vector<128x1xf32> to vector<128x2xf32>
    %50 = arith.mulf %48, %49 : vector<128x2xf32>
    %51 = vector.broadcast %11 : vector<128x1xf32> to vector<128x2xf32>
    %52 = arith.addf %50, %51 : vector<128x2xf32>
    %53 = vector.extract_strided_slice %52 {offsets = [0, 0], sizes = [32, 2], strides = [1, 1]} : vector<128x2xf32> to vector<32x2xf32>
    %54 = vector.extract_strided_slice %52 {offsets = [32, 0], sizes = [32, 2], strides = [1, 1]} : vector<128x2xf32> to vector<32x2xf32>
    %55 = vector.extract_strided_slice %52 {offsets = [64, 0], sizes = [32, 2], strides = [1, 1]} : vector<128x2xf32> to vector<32x2xf32>
    %56 = vector.extract_strided_slice %52 {offsets = [96, 0], sizes = [32, 2], strides = [1, 1]} : vector<128x2xf32> to vector<32x2xf32>
    %57 = arith.mulf %54, %42 : vector<32x2xf32>
    %58 = arith.mulf %53, %55 : vector<32x2xf32>
    %59 = arith.addf %57, %58 : vector<32x2xf32>
    %60 = math.tanh %59 : vector<32x2xf32>
    %61 = arith.mulf %56, %60 : vector<32x2xf32>
    %62 = vector.extract_strided_slice %25 {offsets = [0, 4], sizes = [128, 2], strides = [1, 1]} : vector<128x16xf32> to vector<128x2xf32>
    %cst_17 = arith.constant dense<0.000000e+00> : vector<128x2xf32>
    %63 = tpu.matmul %17, %61, %cst_17 {dimension_numbers = #tpu.dot_dimension_numbers<[1], [0], [0], [1], [0, 0, 1, 1], [], []>} : vector<128x32xf32>, vector<32x2xf32>, vector<128x2xf32> -> vector<128x2xf32>
    %64 = arith.addf %62, %63 : vector<128x2xf32>
    %65 = math.tanh %64 : vector<128x2xf32>
    %66 = vector.broadcast %8 : vector<128x1xf32> to vector<128x2xf32>
    %67 = arith.mulf %65, %66 : vector<128x2xf32>
    %68 = vector.broadcast %11 : vector<128x1xf32> to vector<128x2xf32>
    %69 = arith.addf %67, %68 : vector<128x2xf32>
    %70 = vector.extract_strided_slice %69 {offsets = [0, 0], sizes = [32, 2], strides = [1, 1]} : vector<128x2xf32> to vector<32x2xf32>
    %71 = vector.extract_strided_slice %69 {offsets = [32, 0], sizes = [32, 2], strides = [1, 1]} : vector<128x2xf32> to vector<32x2xf32>
    %72 = vector.extract_strided_slice %69 {offsets = [64, 0], sizes = [32, 2], strides = [1, 1]} : vector<128x2xf32> to vector<32x2xf32>
    %73 = vector.extract_strided_slice %69 {offsets = [96, 0], sizes = [32, 2], strides = [1, 1]} : vector<128x2xf32> to vector<32x2xf32>
    %74 = arith.mulf %71, %59 : vector<32x2xf32>
    %75 = arith.mulf %70, %72 : vector<32x2xf32>
    %76 = arith.addf %74, %75 : vector<32x2xf32>
    %77 = math.tanh %76 : vector<32x2xf32>
    %78 = arith.mulf %73, %77 : vector<32x2xf32>
    %79 = vector.extract_strided_slice %25 {offsets = [0, 6], sizes = [128, 2], strides = [1, 1]} : vector<128x16xf32> to vector<128x2xf32>
    %cst_18 = arith.constant dense<0.000000e+00> : vector<128x2xf32>
    %80 = tpu.matmul %17, %78, %cst_18 {dimension_numbers = #tpu.dot_dimension_numbers<[1], [0], [0], [1], [0, 0, 1, 1], [], []>} : vector<128x32xf32>, vector<32x2xf32>, vector<128x2xf32> -> vector<128x2xf32>
    %81 = arith.addf %79, %80 : vector<128x2xf32>
    %82 = math.tanh %81 : vector<128x2xf32>
    %83 = vector.broadcast %8 : vector<128x1xf32> to vector<128x2xf32>
    %84 = arith.mulf %82, %83 : vector<128x2xf32>
    %85 = vector.broadcast %11 : vector<128x1xf32> to vector<128x2xf32>
    %86 = arith.addf %84, %85 : vector<128x2xf32>
    %87 = vector.extract_strided_slice %86 {offsets = [0, 0], sizes = [32, 2], strides = [1, 1]} : vector<128x2xf32> to vector<32x2xf32>
    %88 = vector.extract_strided_slice %86 {offsets = [32, 0], sizes = [32, 2], strides = [1, 1]} : vector<128x2xf32> to vector<32x2xf32>
    %89 = vector.extract_strided_slice %86 {offsets = [64, 0], sizes = [32, 2], strides = [1, 1]} : vector<128x2xf32> to vector<32x2xf32>
    %90 = vector.extract_strided_slice %86 {offsets = [96, 0], sizes = [32, 2], strides = [1, 1]} : vector<128x2xf32> to vector<32x2xf32>
    %91 = arith.mulf %88, %76 : vector<32x2xf32>
    %92 = arith.mulf %87, %89 : vector<32x2xf32>
    %93 = arith.addf %91, %92 : vector<32x2xf32>
    %94 = math.tanh %93 : vector<32x2xf32>
    %95 = arith.mulf %90, %94 : vector<32x2xf32>
    %96 = vector.extract_strided_slice %25 {offsets = [0, 8], sizes = [128, 2], strides = [1, 1]} : vector<128x16xf32> to vector<128x2xf32>
    %cst_19 = arith.constant dense<0.000000e+00> : vector<128x2xf32>
    %97 = tpu.matmul %17, %95, %cst_19 {dimension_numbers = #tpu.dot_dimension_numbers<[1], [0], [0], [1], [0, 0, 1, 1], [], []>} : vector<128x32xf32>, vector<32x2xf32>, vector<128x2xf32> -> vector<128x2xf32>
    %98 = arith.addf %96, %97 : vector<128x2xf32>
    %99 = math.tanh %98 : vector<128x2xf32>
    %100 = vector.broadcast %8 : vector<128x1xf32> to vector<128x2xf32>
    %101 = arith.mulf %99, %100 : vector<128x2xf32>
    %102 = vector.broadcast %11 : vector<128x1xf32> to vector<128x2xf32>
    %103 = arith.addf %101, %102 : vector<128x2xf32>
    %104 = vector.extract_strided_slice %103 {offsets = [0, 0], sizes = [32, 2], strides = [1, 1]} : vector<128x2xf32> to vector<32x2xf32>
    %105 = vector.extract_strided_slice %103 {offsets = [32, 0], sizes = [32, 2], strides = [1, 1]} : vector<128x2xf32> to vector<32x2xf32>
    %106 = vector.extract_strided_slice %103 {offsets = [64, 0], sizes = [32, 2], strides = [1, 1]} : vector<128x2xf32> to vector<32x2xf32>
    %107 = vector.extract_strided_slice %103 {offsets = [96, 0], sizes = [32, 2], strides = [1, 1]} : vector<128x2xf32> to vector<32x2xf32>
    %108 = arith.mulf %105, %93 : vector<32x2xf32>
    %109 = arith.mulf %104, %106 : vector<32x2xf32>
    %110 = arith.addf %108, %109 : vector<32x2xf32>
    %111 = math.tanh %110 : vector<32x2xf32>
    %112 = arith.mulf %107, %111 : vector<32x2xf32>
    %113 = vector.extract_strided_slice %25 {offsets = [0, 10], sizes = [128, 2], strides = [1, 1]} : vector<128x16xf32> to vector<128x2xf32>
    %cst_20 = arith.constant dense<0.000000e+00> : vector<128x2xf32>
    %114 = tpu.matmul %17, %112, %cst_20 {dimension_numbers = #tpu.dot_dimension_numbers<[1], [0], [0], [1], [0, 0, 1, 1], [], []>} : vector<128x32xf32>, vector<32x2xf32>, vector<128x2xf32> -> vector<128x2xf32>
    %115 = arith.addf %113, %114 : vector<128x2xf32>
    %116 = math.tanh %115 : vector<128x2xf32>
    %117 = vector.broadcast %8 : vector<128x1xf32> to vector<128x2xf32>
    %118 = arith.mulf %116, %117 : vector<128x2xf32>
    %119 = vector.broadcast %11 : vector<128x1xf32> to vector<128x2xf32>
    %120 = arith.addf %118, %119 : vector<128x2xf32>
    %121 = vector.extract_strided_slice %120 {offsets = [0, 0], sizes = [32, 2], strides = [1, 1]} : vector<128x2xf32> to vector<32x2xf32>
    %122 = vector.extract_strided_slice %120 {offsets = [32, 0], sizes = [32, 2], strides = [1, 1]} : vector<128x2xf32> to vector<32x2xf32>
    %123 = vector.extract_strided_slice %120 {offsets = [64, 0], sizes = [32, 2], strides = [1, 1]} : vector<128x2xf32> to vector<32x2xf32>
    %124 = vector.extract_strided_slice %120 {offsets = [96, 0], sizes = [32, 2], strides = [1, 1]} : vector<128x2xf32> to vector<32x2xf32>
    %125 = arith.mulf %122, %110 : vector<32x2xf32>
    %126 = arith.mulf %121, %123 : vector<32x2xf32>
    %127 = arith.addf %125, %126 : vector<32x2xf32>
    %128 = math.tanh %127 : vector<32x2xf32>
    %129 = arith.mulf %124, %128 : vector<32x2xf32>
    %130 = vector.extract_strided_slice %25 {offsets = [0, 12], sizes = [128, 2], strides = [1, 1]} : vector<128x16xf32> to vector<128x2xf32>
    %cst_21 = arith.constant dense<0.000000e+00> : vector<128x2xf32>
    %131 = tpu.matmul %17, %129, %cst_21 {dimension_numbers = #tpu.dot_dimension_numbers<[1], [0], [0], [1], [0, 0, 1, 1], [], []>} : vector<128x32xf32>, vector<32x2xf32>, vector<128x2xf32> -> vector<128x2xf32>
    %132 = arith.addf %130, %131 : vector<128x2xf32>
    %133 = math.tanh %132 : vector<128x2xf32>
    %134 = vector.broadcast %8 : vector<128x1xf32> to vector<128x2xf32>
    %135 = arith.mulf %133, %134 : vector<128x2xf32>
    %136 = vector.broadcast %11 : vector<128x1xf32> to vector<128x2xf32>
    %137 = arith.addf %135, %136 : vector<128x2xf32>
    %138 = vector.extract_strided_slice %137 {offsets = [0, 0], sizes = [32, 2], strides = [1, 1]} : vector<128x2xf32> to vector<32x2xf32>
    %139 = vector.extract_strided_slice %137 {offsets = [32, 0], sizes = [32, 2], strides = [1, 1]} : vector<128x2xf32> to vector<32x2xf32>
    %140 = vector.extract_strided_slice %137 {offsets = [64, 0], sizes = [32, 2], strides = [1, 1]} : vector<128x2xf32> to vector<32x2xf32>
    %141 = vector.extract_strided_slice %137 {offsets = [96, 0], sizes = [32, 2], strides = [1, 1]} : vector<128x2xf32> to vector<32x2xf32>
    %142 = arith.mulf %139, %127 : vector<32x2xf32>
    %143 = arith.mulf %138, %140 : vector<32x2xf32>
    %144 = arith.addf %142, %143 : vector<32x2xf32>
    %145 = math.tanh %144 : vector<32x2xf32>
    %146 = arith.mulf %141, %145 : vector<32x2xf32>
    %147 = vector.extract_strided_slice %25 {offsets = [0, 14], sizes = [128, 2], strides = [1, 1]} : vector<128x16xf32> to vector<128x2xf32>
    %cst_22 = arith.constant dense<0.000000e+00> : vector<128x2xf32>
    %148 = tpu.matmul %17, %146, %cst_22 {dimension_numbers = #tpu.dot_dimension_numbers<[1], [0], [0], [1], [0, 0, 1, 1], [], []>} : vector<128x32xf32>, vector<32x2xf32>, vector<128x2xf32> -> vector<128x2xf32>
    %149 = arith.addf %147, %148 : vector<128x2xf32>
    %150 = math.tanh %149 : vector<128x2xf32>
    %151 = vector.broadcast %8 : vector<128x1xf32> to vector<128x2xf32>
    %152 = arith.mulf %150, %151 : vector<128x2xf32>
    %153 = vector.broadcast %11 : vector<128x1xf32> to vector<128x2xf32>
    %154 = arith.addf %152, %153 : vector<128x2xf32>
    %155 = vector.extract_strided_slice %154 {offsets = [0, 0], sizes = [32, 2], strides = [1, 1]} : vector<128x2xf32> to vector<32x2xf32>
    %156 = vector.extract_strided_slice %154 {offsets = [32, 0], sizes = [32, 2], strides = [1, 1]} : vector<128x2xf32> to vector<32x2xf32>
    %157 = vector.extract_strided_slice %154 {offsets = [64, 0], sizes = [32, 2], strides = [1, 1]} : vector<128x2xf32> to vector<32x2xf32>
    %158 = vector.extract_strided_slice %154 {offsets = [96, 0], sizes = [32, 2], strides = [1, 1]} : vector<128x2xf32> to vector<32x2xf32>
    %159 = arith.mulf %156, %144 : vector<32x2xf32>
    %160 = arith.mulf %155, %157 : vector<32x2xf32>
    %161 = arith.addf %159, %160 : vector<32x2xf32>
    %162 = math.tanh %161 : vector<32x2xf32>
    %163 = arith.mulf %158, %162 : vector<32x2xf32>
    %c0_23 = arith.constant 0 : index
    %c0_24 = arith.constant 0 : index
    %164 = vector.load %arg5[%c0_23, %c0_24] : memref<32x3xf32, #tpu.memory_space<vmem>>, vector<32x3xf32>
    %cst_25 = arith.constant dense<0.000000e+00> : vector<2x3xf32>
    %165 = tpu.matmul %163, %164, %cst_25 {dimension_numbers = #tpu.dot_dimension_numbers<[0], [0], [1], [1], [0, 1, 1, 1], [], []>} : vector<32x2xf32>, vector<32x3xf32>, vector<2x3xf32> -> vector<2x3xf32>
    %c0_26 = arith.constant 0 : index
    %c0_27 = arith.constant 0 : index
    %166 = vector.load %arg6[%c0_26, %c0_27] : memref<1x3xf32, #tpu.memory_space<vmem>>, vector<1x3xf32>
    %167 = vector.broadcast %166 : vector<1x3xf32> to vector<2x3xf32>
    %168 = arith.addf %165, %167 : vector<2x3xf32>
    %c0_28 = arith.constant 0 : index
    %c0_29 = arith.constant 0 : index
    %169 = vector.load %arg7[%c0_28, %c0_29] : memref<2x3xf32, #tpu.memory_space<vmem>>, vector<2x3xf32>
    tpu.vector_store %arg7[%c0_28, %c0_29], %168 {strides = array<i32>} : memref<2x3xf32, #tpu.memory_space<vmem>>, vector<2x3xf32>,
    return
  }
}

</mosaic_0001>

<llo_original>
// kernel: lstm_timeseries_forward.1
$region0: #{lstm_timeseries_forward.1}
  #allocation0 [shape = 'u32[]', space=smem, size = 0x4, offset = 0x4, fixed_abs, tag = 'smem constant byte address 0x4 - core index']
  #allocation1 [shape = 'u32[144,128]{1,0:T(1,128)}', space=vmem, size = 0x12000, scoped, tag = 'internal scratch']
  %s0 = inlined_call_operand.vmem [shape: f32[8,16], index: 0, kind: input, shape index: {}]
  %s1 = inlined_call_operand.vmem [shape: f32[128,8], index: 1, kind: input, shape index: {}]
  %s2 = inlined_call_operand.vmem [shape: f32[128,32], index: 2, kind: input, shape index: {}]
  %s3 = inlined_call_operand.vmem [shape: f32[128,1], index: 3, kind: input, shape index: {}]
  %s4 = inlined_call_operand.vmem [shape: f32[128,1], index: 4, kind: input, shape index: {}]
  %s5 = inlined_call_operand.vmem [shape: f32[32,3], index: 5, kind: input, shape index: {}]
  %s6 = inlined_call_operand.vmem [shape: f32[1,3], index: 6, kind: input, shape index: {}]
  %s7 = inlined_call_operand.hbm [shape: f32[2,3], index: 7, kind: output, shape index: {}]
  %s8 = sld [smem:[#allocation0]]
  $region38: #{lstm_timeseries_forward.1} parent=0
    _
  %s10 = ssub.s32 1, %s8
  %s11 = scalar_select 0, %s10, %s8
  $region1: #{lstm_timeseries_forward.1} parent=0
    #allocation2 [shape = 'u8[1024]{0}', space=vmem, size = 0x400, scoped, tag = 'output window, operand 0, single buffered']
    #allocation3 [shape = 's32[1]{0}', space=sflag, size = 0x4, scoped, tag = 'scoped memory for lstm_timeseries_forward.1']
    %12 = vsyncpa [#allocation3], 0
    // Predicated region
    $region2: #{lstm_timeseries_forward.1} parent=1 // pred_check
      _
    $region3: #{lstm_timeseries_forward.1} parent=1 // pred_check_branch
      %14 = sbr.rel (0) target = $region5
    $region4: #{lstm_timeseries_forward.1} parent=1 // pred_region
      _
    $region5: #{lstm_timeseries_forward.1} parent=1 // pred_fallthru
      _
    // Predicated region
    $region6: #{lstm_timeseries_forward.1} parent=1 // pred_check
      _
    $region7: #{lstm_timeseries_forward.1} parent=1 // pred_check_branch
      %16 = sbr.rel (0) target = $region9
    $region8: #{lstm_timeseries_forward.1} parent=1 // pred_region
      _
    $region9: #{lstm_timeseries_forward.1} parent=1 // pred_fallthru
      _
    // Predicated region
    $region10: #{lstm_timeseries_forward.1} parent=1 // pred_check
      _
    $region11: #{lstm_timeseries_forward.1} parent=1 // pred_check_branch
      %18 = sbr.rel (0) target = $region13
    $region12: #{lstm_timeseries_forward.1} parent=1 // pred_region
      _
    $region13: #{lstm_timeseries_forward.1} parent=1 // pred_fallthru
      _
    // Predicated region
    $region14: #{lstm_timeseries_forward.1} parent=1 // pred_check
      _
    $region15: #{lstm_timeseries_forward.1} parent=1 // pred_check_branch
      %20 = sbr.rel (0) target = $region17
    $region16: #{lstm_timeseries_forward.1} parent=1 // pred_region
      _
    $region17: #{lstm_timeseries_forward.1} parent=1 // pred_fallthru
      _
    // Predicated region
    $region18: #{lstm_timeseries_forward.1} parent=1 // pred_check
      _
    $region19: #{lstm_timeseries_forward.1} parent=1 // pred_check_branch
      %22 = sbr.rel (0) target = $region21
    $region20: #{lstm_timeseries_forward.1} parent=1 // pred_region
      _
    $region21: #{lstm_timeseries_forward.1} parent=1 // pred_fallthru
      _
    // Predicated region
    $region22: #{lstm_timeseries_forward.1} parent=1 // pred_check
      _
    $region23: #{lstm_timeseries_forward.1} parent=1 // pred_check_branch
      %24 = sbr.rel (0) target = $region25
    $region24: #{lstm_timeseries_forward.1} parent=1 // pred_region
      _
    $region25: #{lstm_timeseries_forward.1} parent=1 // pred_fallthru
      _
    // Predicated region
    $region26: #{lstm_timeseries_forward.1} parent=1 // pred_check
      _
    $region27: #{lstm_timeseries_forward.1} parent=1 // pred_check_branch
      %26 = sbr.rel (0) target = $region29
    $region28: #{lstm_timeseries_forward.1} parent=1 // pred_region
      _
    $region29: #{lstm_timeseries_forward.1} parent=1 // pred_fallthru
      _
    %v27 = vlaneseq
    %v28 = vshrl.u32 %v27, 7
    %v29 = vadd.s32 %v28, 8
    %v30 = vadd.s32 %v28, 16
    %v31 = vadd.s32 %v28, 24
    %v32 = vadd.s32 %v28, 32
    %v33 = vadd.s32 %v28, 40
    %v34 = vadd.s32 %v28, 48
    %v35 = vadd.s32 %v28, 56
    %v36 = vadd.s32 %v28, 64
    %v37 = vadd.s32 %v28, 72
    %v38 = vadd.s32 %v28, 80
    %v39 = vadd.s32 %v28, 88
    %v40 = vadd.s32 %v28, 96
    %v41 = vadd.s32 %v28, 104
    %v42 = vadd.s32 %v28, 112
    %v43 = vadd.s32 %v28, 120
    %vm44 = vcmp.ge.s32.totalorder %v28, 64
    %vm45 = vcmp.ge.s32.totalorder %v29, 64
    %vm46 = vcmp.ge.s32.totalorder %v30, 64
    %vm47 = vcmp.ge.s32.totalorder %v31, 64
    %vm48 = vcmp.ge.s32.totalorder %v32, 64
    %vm49 = vcmp.ge.s32.totalorder %v33, 64
    %vm50 = vcmp.ge.s32.totalorder %v34, 64
    %vm51 = vcmp.ge.s32.totalorder %v35, 64
    %vm52 = vcmp.ge.s32.totalorder %v36, 64
    %vm53 = vcmp.ge.s32.totalorder %v37, 64
    %vm54 = vcmp.ge.s32.totalorder %v38, 64
    %vm55 = vcmp.ge.s32.totalorder %v39, 64
    %vm56 = vcmp.ge.s32.totalorder %v40, 64
    %vm57 = vcmp.ge.s32.totalorder %v41, 64
    %vm58 = vcmp.ge.s32.totalorder %v42, 64
    %vm59 = vcmp.ge.s32.totalorder %v43, 64
    %vm60 = vcmp.lt.s32.totalorder %v28, 96
    %vm61 = vcmp.lt.s32.totalorder %v29, 96
    %vm62 = vcmp.lt.s32.totalorder %v30, 96
    %vm63 = vcmp.lt.s32.totalorder %v31, 96
    %vm64 = vcmp.lt.s32.totalorder %v32, 96
    %vm65 = vcmp.lt.s32.totalorder %v33, 96
    %vm66 = vcmp.lt.s32.totalorder %v34, 96
    %vm67 = vcmp.lt.s32.totalorder %v35, 96
    %vm68 = vcmp.lt.s32.totalorder %v36, 96
    %vm69 = vcmp.lt.s32.totalorder %v37, 96
    %vm70 = vcmp.lt.s32.totalorder %v38, 96
    %vm71 = vcmp.lt.s32.totalorder %v39, 96
    %vm72 = vcmp.lt.s32.totalorder %v40, 96
    %vm73 = vcmp.lt.s32.totalorder %v41, 96
    %vm74 = vcmp.lt.s32.totalorder %v42, 96
    %vm75 = vcmp.lt.s32.totalorder %v43, 96
    %vm76 = vmand %vm44, %vm60
    %vm77 = vmand %vm45, %vm61
    %vm78 = vmand %vm46, %vm62
    %vm79 = vmand %vm47, %vm63
    %vm80 = vmand %vm48, %vm64
    %vm81 = vmand %vm49, %vm65
    %vm82 = vmand %vm50, %vm66
    %vm83 = vmand %vm51, %vm67
    %vm84 = vmand %vm52, %vm68
    %vm85 = vmand %vm53, %vm69
    %vm86 = vmand %vm54, %vm70
    %vm87 = vmand %vm55, %vm71
    %vm88 = vmand %vm56, %vm72
    %vm89 = vmand %vm57, %vm73
    %vm90 = vmand %vm58, %vm74
    %vm91 = vmand %vm59, %vm75
    %v92 = vsel %vm76, 1.0, 0.5
    %v93 = vsel %vm77, 1.0, 0.5
    %v94 = vsel %vm78, 1.0, 0.5
    %v95 = vsel %vm79, 1.0, 0.5
    %v96 = vsel %vm80, 1.0, 0.5
    %v97 = vsel %vm81, 1.0, 0.5
    %v98 = vsel %vm82, 1.0, 0.5
    %v99 = vsel %vm83, 1.0, 0.5
    %v100 = vsel %vm84, 1.0, 0.5
    %v101 = vsel %vm85, 1.0, 0.5
    %v102 = vsel %vm86, 1.0, 0.5
    %v103 = vsel %vm87, 1.0, 0.5
    %v104 = vsel %vm88, 1.0, 0.5
    %v105 = vsel %vm89, 1.0, 0.5
    %v106 = vsel %vm90, 1.0, 0.5
    %v107 = vsel %vm91, 1.0, 0.5
    %v108 = vsel %vm76, 0.0, 0.5
    %v109 = vsel %vm77, 0.0, 0.5
    %v110 = vsel %vm78, 0.0, 0.5
    %v111 = vsel %vm79, 0.0, 0.5
    %v112 = vsel %vm80, 0.0, 0.5
    %v113 = vsel %vm81, 0.0, 0.5
    %v114 = vsel %vm82, 0.0, 0.5
    %v115 = vsel %vm83, 0.0, 0.5
    %v116 = vsel %vm84, 0.0, 0.5
    %v117 = vsel %vm85, 0.0, 0.5
    %v118 = vsel %vm86, 0.0, 0.5
    %v119 = vsel %vm87, 0.0, 0.5
    %v120 = vsel %vm88, 0.0, 0.5
    %v121 = vsel %vm89, 0.0, 0.5
    %v122 = vsel %vm90, 0.0, 0.5
    %v123 = vsel %vm91, 0.0, 0.5
    %v124 = vld [vmem:[%s1] sm:$0xff]
    %v125 = vld [vmem:[%s1 + $0x8] sm:$0xff]
    %v126 = vld [vmem:[%s1 + $0x10] sm:$0xff]
    %v127 = vld [vmem:[%s1 + $0x18] sm:$0xff]
    %v128 = vld [vmem:[%s1 + $0x20] sm:$0xff]
    %v129 = vld [vmem:[%s1 + $0x28] sm:$0xff]
    %v130 = vld [vmem:[%s1 + $0x30] sm:$0xff]
    %v131 = vld [vmem:[%s1 + $0x38] sm:$0xff]
    %v132 = vld [vmem:[%s1 + $0x40] sm:$0xff]
    %v133 = vld [vmem:[%s1 + $0x48] sm:$0xff]
    %v134 = vld [vmem:[%s1 + $0x50] sm:$0xff]
    %v135 = vld [vmem:[%s1 + $0x58] sm:$0xff]
    %v136 = vld [vmem:[%s1 + $0x60] sm:$0xff]
    %v137 = vld [vmem:[%s1 + $0x68] sm:$0xff]
    %v138 = vld [vmem:[%s1 + $0x70] sm:$0xff]
    %v139 = vld [vmem:[%s1 + $0x78] sm:$0xff]
    %v140 = vmul.f32 %v124, %v92
    %v141 = vmul.f32 %v125, %v93
    %v142 = vmul.f32 %v126, %v94
    %v143 = vmul.f32 %v127, %v95
    %v144 = vmul.f32 %v128, %v96
    %v145 = vmul.f32 %v129, %v97
    %v146 = vmul.f32 %v130, %v98
    %v147 = vmul.f32 %v131, %v99
    %v148 = vmul.f32 %v132, %v100
    %v149 = vmul.f32 %v133, %v101
    %v150 = vmul.f32 %v134, %v102
    %v151 = vmul.f32 %v135, %v103
    %v152 = vmul.f32 %v136, %v104
    %v153 = vmul.f32 %v137, %v105
    %v154 = vmul.f32 %v138, %v106
    %v155 = vmul.f32 %v139, %v107
    %v156 = vld [vmem:[%s2] sm:$0xff]
    %v157 = vld [vmem:[%s2 + $0x8] sm:$0xff]
    %v158 = vld [vmem:[%s2 + $0x10] sm:$0xff]
    %v159 = vld [vmem:[%s2 + $0x18] sm:$0xff]
    %v160 = vld [vmem:[%s2 + $0x20] sm:$0xff]
    %v161 = vld [vmem:[%s2 + $0x28] sm:$0xff]
    %v162 = vld [vmem:[%s2 + $0x30] sm:$0xff]
    %v163 = vld [vmem:[%s2 + $0x38] sm:$0xff]
    %v164 = vld [vmem:[%s2 + $0x40] sm:$0xff]
    %v165 = vld [vmem:[%s2 + $0x48] sm:$0xff]
    %v166 = vld [vmem:[%s2 + $0x50] sm:$0xff]
    %v167 = vld [vmem:[%s2 + $0x58] sm:$0xff]
    %v168 = vld [vmem:[%s2 + $0x60] sm:$0xff]
    %v169 = vld [vmem:[%s2 + $0x68] sm:$0xff]
    %v170 = vld [vmem:[%s2 + $0x70] sm:$0xff]
    %v171 = vld [vmem:[%s2 + $0x78] sm:$0xff]
    %v172 = vmul.f32 %v156, %v92
    %v173 = vmul.f32 %v157, %v93
    %v174 = vmul.f32 %v158, %v94
    %v175 = vmul.f32 %v159, %v95
    %v176 = vmul.f32 %v160, %v96
    %v177 = vmul.f32 %v161, %v97
    %v178 = vmul.f32 %v162, %v98
    %v179 = vmul.f32 %v163, %v99
    %v180 = vmul.f32 %v164, %v100
    %v181 = vmul.f32 %v165, %v101
    %v182 = vmul.f32 %v166, %v102
    %v183 = vmul.f32 %v167, %v103
    %v184 = vmul.f32 %v168, %v104
    %v185 = vmul.f32 %v169, %v105
    %v186 = vmul.f32 %v170, %v106
    %v187 = vmul.f32 %v171, %v107
    %v188 = vld [vmem:[%s3] sm:$0xff]
    %v189 = vld [vmem:[%s3 + $0x8] sm:$0xff]
    %v190 = vld [vmem:[%s3 + $0x10] sm:$0xff]
    %v191 = vld [vmem:[%s3 + $0x18] sm:$0xff]
    %v192 = vld [vmem:[%s3 + $0x20] sm:$0xff]
    %v193 = vld [vmem:[%s3 + $0x28] sm:$0xff]
    %v194 = vld [vmem:[%s3 + $0x30] sm:$0xff]
    %v195 = vld [vmem:[%s3 + $0x38] sm:$0xff]
    %v196 = vld [vmem:[%s3 + $0x40] sm:$0xff]
    %v197 = vld [vmem:[%s3 + $0x48] sm:$0xff]
    %v198 = vld [vmem:[%s3 + $0x50] sm:$0xff]
    %v199 = vld [vmem:[%s3 + $0x58] sm:$0xff]
    %v200 = vld [vmem:[%s3 + $0x60] sm:$0xff]
    %v201 = vld [vmem:[%s3 + $0x68] sm:$0xff]
    %v202 = vld [vmem:[%s3 + $0x70] sm:$0xff]
    %v203 = vld [vmem:[%s3 + $0x78] sm:$0xff]
    %v204 = vld [vmem:[%s4] sm:$0xff]
    %v205 = vld [vmem:[%s4 + $0x8] sm:$0xff]
    %v206 = vld [vmem:[%s4 + $0x10] sm:$0xff]
    %v207 = vld [vmem:[%s4 + $0x18] sm:$0xff]
    %v208 = vld [vmem:[%s4 + $0x20] sm:$0xff]
    %v209 = vld [vmem:[%s4 + $0x28] sm:$0xff]
    %v210 = vld [vmem:[%s4 + $0x30] sm:$0xff]
    %v211 = vld [vmem:[%s4 + $0x38] sm:$0xff]
    %v212 = vld [vmem:[%s4 + $0x40] sm:$0xff]
    %v213 = vld [vmem:[%s4 + $0x48] sm:$0xff]
    %v214 = vld [vmem:[%s4 + $0x50] sm:$0xff]
    %v215 = vld [vmem:[%s4 + $0x58] sm:$0xff]
    %v216 = vld [vmem:[%s4 + $0x60] sm:$0xff]
    %v217 = vld [vmem:[%s4 + $0x68] sm:$0xff]
    %v218 = vld [vmem:[%s4 + $0x70] sm:$0xff]
    %v219 = vld [vmem:[%s4 + $0x78] sm:$0xff]
    %v220 = vadd.f32 %v188, %v204
    %v221 = vadd.f32 %v189, %v205
    %v222 = vadd.f32 %v190, %v206
    %v223 = vadd.f32 %v191, %v207
    %v224 = vadd.f32 %v192, %v208
    %v225 = vadd.f32 %v193, %v209
    %v226 = vadd.f32 %v194, %v210
    %v227 = vadd.f32 %v195, %v211
    %v228 = vadd.f32 %v196, %v212
    %v229 = vadd.f32 %v197, %v213
    %v230 = vadd.f32 %v198, %v214
    %v231 = vadd.f32 %v199, %v215
    %v232 = vadd.f32 %v200, %v216
    %v233 = vadd.f32 %v201, %v217
    %v234 = vadd.f32 %v202, %v218
    %v235 = vadd.f32 %v203, %v219
    %v236 = vmul.f32 %v220, %v92
    %v237 = vmul.f32 %v221, %v93
    %v238 = vmul.f32 %v222, %v94
    %v239 = vmul.f32 %v223, %v95
    %v240 = vmul.f32 %v224, %v96
    %v241 = vmul.f32 %v225, %v97
    %v242 = vmul.f32 %v226, %v98
    %v243 = vmul.f32 %v227, %v99
    %v244 = vmul.f32 %v228, %v100
    %v245 = vmul.f32 %v229, %v101
    %v246 = vmul.f32 %v230, %v102
    %v247 = vmul.f32 %v231, %v103
    %v248 = vmul.f32 %v232, %v104
    %v249 = vmul.f32 %v233, %v105
    %v250 = vmul.f32 %v234, %v106
    %v251 = vmul.f32 %v235, %v107
    %v252 = vld [vmem:[%s0] sm:$0xff]
    %254 = vset.pattern.permute.xlu0 0
    %255 = vperm.xlu0 %254, %v236
    %v256 = vpop.permute.xlu0 %255
    %259 = vset.pattern.permute.xlu0 0
    %260 = vperm.xlu0 %259, %v237
    %v261 = vpop.permute.xlu0 %260
    %264 = vset.pattern.permute.xlu0 0
    %265 = vperm.xlu0 %264, %v238
    %v266 = vpop.permute.xlu0 %265
    %269 = vset.pattern.permute.xlu0 0
    %270 = vperm.xlu0 %269, %v239
    %v271 = vpop.permute.xlu0 %270
    %274 = vset.pattern.permute.xlu0 0
    %275 = vperm.xlu0 %274, %v240
    %v276 = vpop.permute.xlu0 %275
    %279 = vset.pattern.permute.xlu0 0
    %280 = vperm.xlu0 %279, %v241
    %v281 = vpop.permute.xlu0 %280
    %284 = vset.pattern.permute.xlu0 0
    %285 = vperm.xlu0 %284, %v242
    %v286 = vpop.permute.xlu0 %285
    %289 = vset.pattern.permute.xlu0 0
    %290 = vperm.xlu0 %289, %v243
    %v291 = vpop.permute.xlu0 %290
    %294 = vset.pattern.permute.xlu0 0
    %295 = vperm.xlu0 %294, %v244
    %v296 = vpop.permute.xlu0 %295
    %299 = vset.pattern.permute.xlu0 0
    %300 = vperm.xlu0 %299, %v245
    %v301 = vpop.permute.xlu0 %300
    %304 = vset.pattern.permute.xlu0 0
    %305 = vperm.xlu0 %304, %v246
    %v306 = vpop.permute.xlu0 %305
    %309 = vset.pattern.permute.xlu0 0
    %310 = vperm.xlu0 %309, %v247
    %v311 = vpop.permute.xlu0 %310
    %314 = vset.pattern.permute.xlu0 0
    %315 = vperm.xlu0 %314, %v248
    %v316 = vpop.permute.xlu0 %315
    %319 = vset.pattern.permute.xlu0 0
    %320 = vperm.xlu0 %319, %v249
    %v321 = vpop.permute.xlu0 %320
    %324 = vset.pattern.permute.xlu0 0
    %325 = vperm.xlu0 %324, %v250
    %v326 = vpop.permute.xlu0 %325
    %329 = vset.pattern.permute.xlu0 0
    %330 = vperm.xlu0 %329, %v251
    %v331 = vpop.permute.xlu0 %330
    %vm333 = vcmask 64512
    %v335 = vsel %vm333, %v140, 0
    %v338 = vsel %vm333, %v141, 0
    %v341 = vsel %vm333, %v142, 0
    %v344 = vsel %vm333, %v143, 0
    %v347 = vsel %vm333, %v144, 0
    %v350 = vsel %vm333, %v145, 0
    %v353 = vsel %vm333, %v146, 0
    %v356 = vsel %vm333, %v147, 0
    %v359 = vsel %vm333, %v148, 0
    %v362 = vsel %vm333, %v149, 0
    %v365 = vsel %vm333, %v150, 0
    %v368 = vsel %vm333, %v151, 0
    %v371 = vsel %vm333, %v152, 0
    %v374 = vsel %vm333, %v153, 0
    %v377 = vsel %vm333, %v154, 0
    %v380 = vsel %vm333, %v155, 0
    %382 = vmatprep.subr.mxu0 0.0
    %383 = vmatpush1.msra.mxu0 %v252
    %384 = vmatprep.subr.mxu0 0.0
    %385 = vmatpush1.msra.mxu0 0.0
    %386 = vmatprep.subr.mxu0 0.0
    %387 = vmatpush1.msra.mxu0 0.0
    %388 = vmatprep.subr.mxu0 0.0
    %389 = vmatpush1.msra.mxu0 0.0
    %390 = vmatprep.subr.mxu0 0.0
    %391 = vmatpush1.msra.mxu0 0.0
    %392 = vmatprep.subr.mxu0 0.0
    %393 = vmatpush1.msra.mxu0 0.0
    %394 = vmatprep.subr.mxu0 0.0
    %395 = vmatpush1.msra.mxu0 0.0
    %396 = vmatprep.subr.mxu0 0.0
    %397 = vmatpush1.msra.mxu0 0.0
    %398 = vmatprep.subr.mxu0 0.0
    %399 = vmatpush1.msra.mxu0 0.0
    %400 = vmatprep.subr.mxu0 0.0
    %401 = vmatpush1.msra.mxu0 0.0
    %402 = vmatprep.subr.mxu0 0.0
    %403 = vmatpush1.msra.mxu0 0.0
    %404 = vmatprep.subr.mxu0 0.0
    %405 = vmatpush1.msra.mxu0 0.0
    %406 = vmatprep.subr.mxu0 0.0
    %407 = vmatpush1.msra.mxu0 0.0
    %408 = vmatprep.subr.mxu0 0.0
    %409 = vmatpush1.msra.mxu0 0.0
    %410 = vmatprep.subr.mxu0 0.0
    %411 = vmatpush1.msra.mxu0 0.0
    %412 = vmatprep.subr.mxu0 0.0
    %413 = vmatpush1.msra.mxu0 0.0
    %414 = vmatprep.subr.mxu0 0.0
    %415 = vmatpush1.msra.mxu0 0.0
    %416 = vmatprep.subr.mxu0 0.0
    %417 = vmatpush1.msra.mxu0 0.0
    %418 = vmatprep.subr.mxu0 0.0
    %419 = vmatpush1.msra.mxu0 0.0
    %420 = vmatprep.subr.mxu0 0.0
    %421 = vmatpush1.msra.mxu0 0.0
    %422 = vmatprep.subr.mxu0 0.0
    %423 = vmatpush1.msra.mxu0 0.0
    %424 = vmatprep.subr.mxu0 0.0
    %425 = vmatpush1.msra.mxu0 0.0
    %426 = vmatprep.subr.mxu0 0.0
    %427 = vmatpush1.msra.mxu0 0.0
    %428 = vmatprep.subr.mxu0 0.0
    %429 = vmatpush1.msra.mxu0 0.0
    %430 = vmatprep.subr.mxu0 0.0
    %431 = vmatpush1.msra.mxu0 0.0
    %432 = vmatprep.subr.mxu0 0.0
    %433 = vmatpush1.msra.mxu0 0.0
    %434 = vmatprep.subr.mxu0 0.0
    %435 = vmatpush1.msra.mxu0 0.0
    %436 = vmatprep.subr.mxu0 0.0
    %437 = vmatpush1.msra.mxu0 0.0
    %438 = vmatprep.subr.mxu0 0.0
    %439 = vmatpush1.msra.mxu0 0.0
    %440 = vmatprep.subr.mxu0 0.0
    %441 = vmatpush1.msra.mxu0 0.0
    %442 = vmatprep.subr.mxu0 0.0
    %443 = vmatpush1.msra.mxu0 0.0
    %444 = vmatprep.subr.mxu0 0.0
    %445 = vmatpush1.msra.mxu0 0.0
    %446 = vmatprep.mubr.f32.mxu0 0.0
    %447 = vmatmul.mubr.f32.gmra.mrb[0].mxu0 %v335
    %v448 = vpop.f32.mrb[0].mxu0
    %v449 = vadd.f32 %v256, %v448
    %v450 = vpop.f32.mrb[0].mxu0
    %451 = vmatprep.mubr.f32.mxu0 0.0
    %452 = vmatmul.mubr.f32.gmra.mrb[0].mxu0 %v338
    %v453 = vpop.f32.mrb[0].mxu0
    %v454 = vadd.f32 %v261, %v453
    %v455 = vpop.f32.mrb[0].mxu0
    %456 = vmatprep.mubr.f32.mxu0 0.0
    %457 = vmatmul.mubr.f32.gmra.mrb[0].mxu0 %v341
    %v458 = vpop.f32.mrb[0].mxu0
    %v459 = vadd.f32 %v266, %v458
    %v460 = vpop.f32.mrb[0].mxu0
    %461 = vmatprep.mubr.f32.mxu0 0.0
    %462 = vmatmul.mubr.f32.gmra.mrb[0].mxu0 %v344
    %v463 = vpop.f32.mrb[0].mxu0
    %v464 = vadd.f32 %v271, %v463
    %v465 = vpop.f32.mrb[0].mxu0
    %466 = vmatprep.mubr.f32.mxu0 0.0
    %467 = vmatmul.mubr.f32.gmra.mrb[0].mxu0 %v347
    %v468 = vpop.f32.mrb[0].mxu0
    %v469 = vadd.f32 %v276, %v468
    %v470 = vpop.f32.mrb[0].mxu0
    %471 = vmatprep.mubr.f32.mxu0 0.0
    %472 = vmatmul.mubr.f32.gmra.mrb[0].mxu0 %v350
    %v473 = vpop.f32.mrb[0].mxu0
    %v474 = vadd.f32 %v281, %v473
    %v475 = vpop.f32.mrb[0].mxu0
    %476 = vmatprep.mubr.f32.mxu0 0.0
    %477 = vmatmul.mubr.f32.gmra.mrb[0].mxu0 %v353
    %v478 = vpop.f32.mrb[0].mxu0
    %v479 = vadd.f32 %v286, %v478
    %v480 = vpop.f32.mrb[0].mxu0
    %481 = vmatprep.mubr.f32.mxu0 0.0
    %482 = vmatmul.mubr.f32.gmra.mrb[0].mxu0 %v356
    %v483 = vpop.f32.mrb[0].mxu0
    %v484 = vadd.f32 %v291, %v483
    %v485 = vpop.f32.mrb[0].mxu0
    %486 = vmatprep.mubr.f32.mxu0 0.0
    %487 = vmatmul.mubr.f32.gmra.mrb[0].mxu0 %v359
    %v488 = vpop.f32.mrb[0].mxu0
    %v489 = vadd.f32 %v296, %v488
    %v490 = vpop.f32.mrb[0].mxu0
    %491 = vmatprep.mubr.f32.mxu0 0.0
    %492 = vmatmul.mubr.f32.gmra.mrb[0].mxu0 %v362
    %v493 = vpop.f32.mrb[0].mxu0
    %v494 = vadd.f32 %v301, %v493
    %v495 = vpop.f32.mrb[0].mxu0
    %496 = vmatprep.mubr.f32.mxu0 0.0
    %497 = vmatmul.mubr.f32.gmra.mrb[0].mxu0 %v365
    %v498 = vpop.f32.mrb[0].mxu0
    %v499 = vadd.f32 %v306, %v498
    %v500 = vpop.f32.mrb[0].mxu0
    %501 = vmatprep.mubr.f32.mxu0 0.0
    %502 = vmatmul.mubr.f32.gmra.mrb[0].mxu0 %v368
    %v503 = vpop.f32.mrb[0].mxu0
    %v504 = vadd.f32 %v311, %v503
    %v505 = vpop.f32.mrb[0].mxu0
    %506 = vmatprep.mubr.f32.mxu0 0.0
    %507 = vmatmul.mubr.f32.gmra.mrb[0].mxu0 %v371
    %v508 = vpop.f32.mrb[0].mxu0
    %v509 = vadd.f32 %v316, %v508
    %v510 = vpop.f32.mrb[0].mxu0
    %511 = vmatprep.mubr.f32.mxu0 0.0
    %512 = vmatmul.mubr.f32.gmra.mrb[0].mxu0 %v374
    %v513 = vpop.f32.mrb[0].mxu0
    %v514 = vadd.f32 %v321, %v513
    %v515 = vpop.f32.mrb[0].mxu0
    %516 = vmatprep.mubr.f32.mxu0 0.0
    %517 = vmatmul.mubr.f32.gmra.mrb[0].mxu0 %v377
    %v518 = vpop.f32.mrb[0].mxu0
    %v519 = vadd.f32 %v326, %v518
    %v520 = vpop.f32.mrb[0].mxu0
    %521 = vmatprep.mubr.f32.mxu0 0.0
    %522 = vmatmul.mubr.f32.gmra.mrb[0].mxu0 %v380
    %v523 = vpop.f32.mrb[0].mxu0
    %v524 = vadd.f32 %v331, %v523
    %v525 = vpop.f32.mrb[0].mxu0
    %526 = vdwg.mxu0
    %vm527 = vcmask 261120
    %v529 = vsel %vm527, %v172, 0
    %v532 = vsel %vm527, %v173, 0
    %v535 = vsel %vm527, %v174, 0
    %v538 = vsel %vm527, %v175, 0
    %v541 = vsel %vm527, %v176, 0
    %v544 = vsel %vm527, %v177, 0
    %v547 = vsel %vm527, %v178, 0
    %v550 = vsel %vm527, %v179, 0
    %v553 = vsel %vm527, %v180, 0
    %v556 = vsel %vm527, %v181, 0
    %v559 = vsel %vm527, %v182, 0
    %v562 = vsel %vm527, %v183, 0
    %v565 = vsel %vm527, %v184, 0
    %v568 = vsel %vm527, %v185, 0
    %v571 = vsel %vm527, %v186, 0
    %v574 = vsel %vm527, %v187, 0
    %576 = vmatprep.subr.mxu0 0.0
    %577 = vmatpush1.msra.mxu0 0.0
    %578 = vmatprep.subr.mxu0 0.0
    %579 = vmatpush1.msra.mxu0 0.0
    %580 = vmatprep.subr.mxu0 0.0
    %581 = vmatpush1.msra.mxu0 0.0
    %582 = vmatprep.subr.mxu0 0.0
    %583 = vmatpush1.msra.mxu0 0.0
    %584 = vmatprep.subr.mxu0 0.0
    %585 = vmatpush1.msra.mxu0 0.0
    %586 = vmatprep.subr.mxu0 0.0
    %587 = vmatpush1.msra.mxu0 0.0
    %588 = vmatprep.subr.mxu0 0.0
    %589 = vmatpush1.msra.mxu0 0.0
    %590 = vmatprep.subr.mxu0 0.0
    %591 = vmatpush1.msra.mxu0 0.0
    %592 = vmatprep.subr.mxu0 0.0
    %593 = vmatpush1.msra.mxu0 0.0
    %594 = vmatprep.subr.mxu0 0.0
    %595 = vmatpush1.msra.mxu0 0.0
    %596 = vmatprep.subr.mxu0 0.0
    %597 = vmatpush1.msra.mxu0 0.0
    %598 = vmatprep.subr.mxu0 0.0
    %599 = vmatpush1.msra.mxu0 0.0
    %600 = vmatprep.subr.mxu0 0.0
    %601 = vmatpush1.msra.mxu0 0.0
    %602 = vmatprep.subr.mxu0 0.0
    %603 = vmatpush1.msra.mxu0 0.0
    %604 = vmatprep.subr.mxu0 0.0
    %605 = vmatpush1.msra.mxu0 0.0
    %606 = vmatprep.subr.mxu0 0.0
    %607 = vmatpush1.msra.mxu0 0.0
    %608 = vmatprep.subr.mxu0 0.0
    %609 = vmatpush1.msra.mxu0 0.0
    %610 = vmatprep.subr.mxu0 0.0
    %611 = vmatpush1.msra.mxu0 0.0
    %612 = vmatprep.subr.mxu0 0.0
    %613 = vmatpush1.msra.mxu0 0.0
    %614 = vmatprep.subr.mxu0 0.0
    %615 = vmatpush1.msra.mxu0 0.0
    %616 = vmatprep.subr.mxu0 0.0
    %617 = vmatpush1.msra.mxu0 0.0
    %618 = vmatprep.subr.mxu0 0.0
    %619 = vmatpush1.msra.mxu0 0.0
    %620 = vmatprep.subr.mxu0 0.0
    %621 = vmatpush1.msra.mxu0 0.0
    %622 = vmatprep.subr.mxu0 0.0
    %623 = vmatpush1.msra.mxu0 0.0
    %624 = vmatprep.subr.mxu0 0.0
    %625 = vmatpush1.msra.mxu0 0.0
    %626 = vmatprep.subr.mxu0 0.0
    %627 = vmatpush1.msra.mxu0 0.0
    %628 = vmatprep.subr.mxu0 0.0
    %629 = vmatpush1.msra.mxu0 0.0
    %630 = vmatprep.subr.mxu0 0.0
    %631 = vmatpush1.msra.mxu0 0.0
    %632 = vmatprep.subr.mxu0 0.0
    %633 = vmatpush1.msra.mxu0 0.0
    %634 = vmatprep.subr.mxu0 0.0
    %635 = vmatpush1.msra.mxu0 0.0
    %636 = vmatprep.subr.mxu0 0.0
    %637 = vmatpush1.msra.mxu0 0.0
    %638 = vmatprep.subr.mxu0 0.0
    %639 = vmatpush1.msra.mxu0 0.0
    %640 = vmatprep.mubr.f32.mxu0 0.0
    %641 = vmatmul.mubr.f32.gmra.mrb[0].mxu0 %v529
    %v642 = vpop.f32.mrb[0].mxu0
    %v643 = vadd.f32 0.0, %v642
    %v644 = vpop.f32.mrb[0].mxu0
    %645 = vmatprep.mubr.f32.mxu0 0.0
    %646 = vmatmul.mubr.f32.gmra.mrb[0].mxu0 %v532
    %v647 = vpop.f32.mrb[0].mxu0
    %v648 = vadd.f32 0.0, %v647
    %v649 = vpop.f32.mrb[0].mxu0
    %650 = vmatprep.mubr.f32.mxu0 0.0
    %651 = vmatmul.mubr.f32.gmra.mrb[0].mxu0 %v535
    %v652 = vpop.f32.mrb[0].mxu0
    %v653 = vadd.f32 0.0, %v652
    %v654 = vpop.f32.mrb[0].mxu0
    %655 = vmatprep.mubr.f32.mxu0 0.0
    %656 = vmatmul.mubr.f32.gmra.mrb[0].mxu0 %v538
    %v657 = vpop.f32.mrb[0].mxu0
    %v658 = vadd.f32 0.0, %v657
    %v659 = vpop.f32.mrb[0].mxu0
    %660 = vmatprep.mubr.f32.mxu0 0.0
    %661 = vmatmul.mubr.f32.gmra.mrb[0].mxu0 %v541
    %v662 = vpop.f32.mrb[0].mxu0
    %v663 = vadd.f32 0.0, %v662
    %v664 = vpop.f32.mrb[0].mxu0
    %665 = vmatprep.mubr.f32.mxu0 0.0
    %666 = vmatmul.mubr.f32.gmra.mrb[0].mxu0 %v544
    %v667 = vpop.f32.mrb[0].mxu0
    %v668 = vadd.f32 0.0, %v667
    %v669 = vpop.f32.mrb[0].mxu0
    %670 = vmatprep.mubr.f32.mxu0 0.0
    %671 = vmatmul.mubr.f32.gmra.mrb[0].mxu0 %v547
    %v672 = vpop.f32.mrb[0].mxu0
    %v673 = vadd.f32 0.0, %v672
    %v674 = vpop.f32.mrb[0].mxu0
    %675 = vmatprep.mubr.f32.mxu0 0.0
    %676 = vmatmul.mubr.f32.gmra.mrb[0].mxu0 %v550
    %v677 = vpop.f32.mrb[0].mxu0
    %v678 = vadd.f32 0.0, %v677
    %v679 = vpop.f32.mrb[0].mxu0
    %680 = vmatprep.mubr.f32.mxu0 0.0
    %681 = vmatmul.mubr.f32.gmra.mrb[0].mxu0 %v553
    %v682 = vpop.f32.mrb[0].mxu0
    %v683 = vadd.f32 0.0, %v682
    %v684 = vpop.f32.mrb[0].mxu0
    %685 = vmatprep.mubr.f32.mxu0 0.0
    %686 = vmatmul.mubr.f32.gmra.mrb[0].mxu0 %v556
    %v687 = vpop.f32.mrb[0].mxu0
    %v688 = vadd.f32 0.0, %v687
    %v689 = vpop.f32.mrb[0].mxu0
    %690 = vmatprep.mubr.f32.mxu0 0.0
    %691 = vmatmul.mubr.f32.gmra.mrb[0].mxu0 %v559
    %v692 = vpop.f32.mrb[0].mxu0
    %v693 = vadd.f32 0.0, %v692
    %v694 = vpop.f32.mrb[0].mxu0
    %695 = vmatprep.mubr.f32.mxu0 0.0
    %696 = vmatmul.mubr.f32.gmra.mrb[0].mxu0 %v562
    %v697 = vpop.f32.mrb[0].mxu0
    %v698 = vadd.f32 0.0, %v697
    %v699 = vpop.f32.mrb[0].mxu0
    %700 = vmatprep.mubr.f32.mxu0 0.0
    %701 = vmatmul.mubr.f32.gmra.mrb[0].mxu0 %v565
    %v702 = vpop.f32.mrb[0].mxu0
    %v703 = vadd.f32 0.0, %v702
    %v704 = vpop.f32.mrb[0].mxu0
    %705 = vmatprep.mubr.f32.mxu0 0.0
    %706 = vmatmul.mubr.f32.gmra.mrb[0].mxu0 %v568
    %v707 = vpop.f32.mrb[0].mxu0
    %v708 = vadd.f32 0.0, %v707
    %v709 = vpop.f32.mrb[0].mxu0
    %710 = vmatprep.mubr.f32.mxu0 0.0
    %711 = vmatmul.mubr.f32.gmra.mrb[0].mxu0 %v571
    %v712 = vpop.f32.mrb[0].mxu0
    %v713 = vadd.f32 0.0, %v712
    %v714 = vpop.f32.mrb[0].mxu0
    %715 = vmatprep.mubr.f32.mxu0 0.0
    %716 = vmatmul.mubr.f32.gmra.mrb[0].mxu0 %v574
    %v717 = vpop.f32.mrb[0].mxu0
    %v718 = vadd.f32 0.0, %v717
    %v719 = vpop.f32.mrb[0].mxu0
    %720 = vdwg.mxu0
    %v721 = vadd.f32 %v449, %v643
    %v722 = vadd.f32 %v454, %v648
    %v723 = vadd.f32 %v459, %v653
    %v724 = vadd.f32 %v464, %v658
    %v725 = vadd.f32 %v469, %v663
    %v726 = vadd.f32 %v474, %v668
    %v727 = vadd.f32 %v479, %v673
    %v728 = vadd.f32 %v484, %v678
    %v729 = vadd.f32 %v489, %v683
    %v730 = vadd.f32 %v494, %v688
    %v731 = vadd.f32 %v499, %v693
    %v732 = vadd.f32 %v504, %v698
    %v733 = vadd.f32 %v509, %v703
    %v734 = vadd.f32 %v514, %v708
    %v735 = vadd.f32 %v519, %v713
    %v736 = vadd.f32 %v524, %v718
    %v737 = vtanh.pop %v721
    %v738 = vtanh.pop %v722
    %v739 = vtanh.pop %v723
    %v740 = vtanh.pop %v724
    %v741 = vtanh.pop %v725
    %v742 = vtanh.pop %v726
    %v743 = vtanh.pop %v727
    %v744 = vtanh.pop %v728
    %v745 = vtanh.pop %v729
    %v746 = vtanh.pop %v730
    %v747 = vtanh.pop %v731
    %v748 = vtanh.pop %v732
    %v749 = vtanh.pop %v733
    %v750 = vtanh.pop %v734
    %v751 = vtanh.pop %v735
    %v752 = vtanh.pop %v736
    %v753 = vmul.f32 %v737, %v92
    %v754 = vmul.f32 %v738, %v93
    %v755 = vmul.f32 %v739, %v94
    %v756 = vmul.f32 %v740, %v95
    %v757 = vmul.f32 %v741, %v96
    %v758 = vmul.f32 %v742, %v97
    %v759 = vmul.f32 %v743, %v98
    %v760 = vmul.f32 %v744, %v99
    %v761 = vmul.f32 %v745, %v100
    %v762 = vmul.f32 %v746, %v101
    %v763 = vmul.f32 %v747, %v102
    %v764 = vmul.f32 %v748, %v103
    %v765 = vmul.f32 %v749, %v104
    %v766 = vmul.f32 %v750, %v105
    %v767 = vmul.f32 %v751, %v106
    %v768 = vmul.f32 %v752, %v107
    %v769 = vadd.f32 %v753, %v108
    %v770 = vadd.f32 %v754, %v109
    %v771 = vadd.f32 %v755, %v110
    %v772 = vadd.f32 %v756, %v111
    %v773 = vadd.f32 %v757, %v112
    %v774 = vadd.f32 %v758, %v113
    %v775 = vadd.f32 %v759, %v114
    %v776 = vadd.f32 %v760, %v115
    %v777 = vadd.f32 %v761, %v116
    %v778 = vadd.f32 %v762, %v117
    %v779 = vadd.f32 %v763, %v118
    %v780 = vadd.f32 %v764, %v119
    %v781 = vadd.f32 %v765, %v120
    %v782 = vadd.f32 %v766, %v121
    %v783 = vadd.f32 %v767, %v122
    %v784 = vadd.f32 %v768, %v123
    %v785 = vmul.f32 %v773, 0.0
    %v786 = vmul.f32 %v774, 0.0
    %v787 = vmul.f32 %v775, 0.0
    %v788 = vmul.f32 %v776, 0.0
    %v789 = vmul.f32 %v769, %v777
    %v790 = vmul.f32 %v770, %v778
    %v791 = vmul.f32 %v771, %v779
    %v792 = vmul.f32 %v772, %v780
    %v793 = vadd.f32 %v785, %v789
    %v794 = vadd.f32 %v786, %v790
    %v795 = vadd.f32 %v787, %v791
    %v796 = vadd.f32 %v788, %v792
    %v797 = vtanh.pop %v793
    %v798 = vtanh.pop %v794
    %v799 = vtanh.pop %v795
    %v800 = vtanh.pop %v796
    %v801 = vmul.f32 %v781, %v797
    %v802 = vmul.f32 %v782, %v798
    %v803 = vmul.f32 %v783, %v799
    %v804 = vmul.f32 %v784, %v800
    %805 = vmatprep.subr.mxu0 0.0
    %806 = vmatpush1.msra.mxu0 %v801
    %807 = vmatprep.subr.mxu0 0.0
    %808 = vmatpush1.msra.mxu0 %v802
    %809 = vmatprep.subr.mxu0 0.0
    %810 = vmatpush1.msra.mxu0 %v803
    %811 = vmatprep.subr.mxu0 0.0
    %812 = vmatpush1.msra.mxu0 %v804
    %813 = vmatprep.subr.mxu0 0.0
    %814 = vmatpush1.msra.mxu0 0.0
    %815 = vmatprep.subr.mxu0 0.0
    %816 = vmatpush1.msra.mxu0 0.0
    %817 = vmatprep.subr.mxu0 0.0
    %818 = vmatpush1.msra.mxu0 0.0
    %819 = vmatprep.subr.mxu0 0.0
    %820 = vmatpush1.msra.mxu0 0.0
    %821 = vmatprep.subr.mxu0 0.0
    %822 = vmatpush1.msra.mxu0 0.0
    %823 = vmatprep.subr.mxu0 0.0
    %824 = vmatpush1.msra.mxu0 0.0
    %825 = vmatprep.subr.mxu0 0.0
    %826 = vmatpush1.msra.mxu0 0.0
    %827 = vmatprep.subr.mxu0 0.0
    %828 = vmatpush1.msra.mxu0 0.0
    %829 = vmatprep.subr.mxu0 0.0
    %830 = vmatpush1.msra.mxu0 0.0
    %831 = vmatprep.subr.mxu0 0.0
    %832 = vmatpush1.msra.mxu0 0.0
    %833 = vmatprep.subr.mxu0 0.0
    %834 = vmatpush1.msra.mxu0 0.0
    %835 = vmatprep.subr.mxu0 0.0
    %836 = vmatpush1.msra.mxu0 0.0
    %837 = vmatprep.subr.mxu0 0.0
    %838 = vmatpush1.msra.mxu0 0.0
    %839 = vmatprep.subr.mxu0 0.0
    %840 = vmatpush1.msra.mxu0 0.0
    %841 = vmatprep.subr.mxu0 0.0
    %842 = vmatpush1.msra.mxu0 0.0
    %843 = vmatprep.subr.mxu0 0.0
    %844 = vmatpush1.msra.mxu0 0.0
    %845 = vmatprep.subr.mxu0 0.0
    %846 = vmatpush1.msra.mxu0 0.0
    %847 = vmatprep.subr.mxu0 0.0
    %848 = vmatpush1.msra.mxu0 0.0
    %849 = vmatprep.subr.mxu0 0.0
    %850 = vmatpush1.msra.mxu0 0.0
    %851 = vmatprep.subr.mxu0 0.0
    %852 = vmatpush1.msra.mxu0 0.0
    %853 = vmatprep.subr.mxu0 0.0
    %854 = vmatpush1.msra.mxu0 0.0
    %855 = vmatprep.subr.mxu0 0.0
    %856 = vmatpush1.msra.mxu0 0.0
    %857 = vmatprep.subr.mxu0 0.0
    %858 = vmatpush1.msra.mxu0 0.0
    %859 = vmatprep.subr.mxu0 0.0
    %860 = vmatpush1.msra.mxu0 0.0
    %861 = vmatprep.subr.mxu0 0.0
    %862 = vmatpush1.msra.mxu0 0.0
    %863 = vmatprep.subr.mxu0 0.0
    %864 = vmatpush1.msra.mxu0 0.0
    %865 = vmatprep.subr.mxu0 0.0
    %866 = vmatpush1.msra.mxu0 0.0
    %867 = vmatprep.subr.mxu0 0.0
    %868 = vmatpush1.msra.mxu0 0.0
    %869 = vmatprep.mubr.f32.mxu0 0.0
    %870 = vmatmul.mubr.f32.gmra.mrb[0].mxu0 %v529
    %v871 = vpop.f32.mrb[0].mxu0
    %v872 = vadd.f32 0.0, %v871
    %v873 = vpop.f32.mrb[0].mxu0
    %874 = vmatprep.mubr.f32.mxu0 0.0
    %875 = vmatmul.mubr.f32.gmra.mrb[0].mxu0 %v532
    %v876 = vpop.f32.mrb[0].mxu0
    %v877 = vadd.f32 0.0, %v876
    %v878 = vpop.f32.mrb[0].mxu0
    %879 = vmatprep.mubr.f32.mxu0 0.0
    %880 = vmatmul.mubr.f32.gmra.mrb[0].mxu0 %v535
    %v881 = vpop.f32.mrb[0].mxu0
    %v882 = vadd.f32 0.0, %v881
    %v883 = vpop.f32.mrb[0].mxu0
    %884 = vmatprep.mubr.f32.mxu0 0.0
    %885 = vmatmul.mubr.f32.gmra.mrb[0].mxu0 %v538
    %v886 = vpop.f32.mrb[0].mxu0
    %v887 = vadd.f32 0.0, %v886
    %v888 = vpop.f32.mrb[0].mxu0
    %889 = vmatprep.mubr.f32.mxu0 0.0
    %890 = vmatmul.mubr.f32.gmra.mrb[0].mxu0 %v541
    %v891 = vpop.f32.mrb[0].mxu0
    %v892 = vadd.f32 0.0, %v891
    %v893 = vpop.f32.mrb[0].mxu0
    %894 = vmatprep.mubr.f32.mxu0 0.0
    %895 = vmatmul.mubr.f32.gmra.mrb[0].mxu0 %v544
    %v896 = vpop.f32.mrb[0].mxu0
    %v897 = vadd.f32 0.0, %v896
    %v898 = vpop.f32.mrb[0].mxu0
    %899 = vmatprep.mubr.f32.mxu0 0.0
    %900 = vmatmul.mubr.f32.gmra.mrb[0].mxu0 %v547
    %v901 = vpop.f32.mrb[0].mxu0
    %v902 = vadd.f32 0.0, %v901
    %v903 = vpop.f32.mrb[0].mxu0
    %904 = vmatprep.mubr.f32.mxu0 0.0
    %905 = vmatmul.mubr.f32.gmra.mrb[0].mxu0 %v550
    %v906 = vpop.f32.mrb[0].mxu0
    %v907 = vadd.f32 0.0, %v906
    %v908 = vpop.f32.mrb[0].mxu0
    %909 = vmatprep.mubr.f32.mxu0 0.0
    %910 = vmatmul.mubr.f32.gmra.mrb[0].mxu0 %v553
    %v911 = vpop.f32.mrb[0].mxu0
    %v912 = vadd.f32 0.0, %v911
    %v913 = vpop.f32.mrb[0].mxu0
    %914 = vmatprep.mubr.f32.mxu0 0.0
    %915 = vmatmul.mubr.f32.gmra.mrb[0].mxu0 %v556
    %v916 = vpop.f32.mrb[0].mxu0
    %v917 = vadd.f32 0.0, %v916
    %v918 = vpop.f32.mrb[0].mxu0
    %919 = vmatprep.mubr.f32.mxu0 0.0
    %920 = vmatmul.mubr.f32.gmra.mrb[0].mxu0 %v559
    %v921 = vpop.f32.mrb[0].mxu0
    %v922 = vadd.f32 0.0, %v921
    %v923 = vpop.f32.mrb[0].mxu0
    %924 = vmatprep.mubr.f32.mxu0 0.0
    %925 = vmatmul.mubr.f32.gmra.mrb[0].mxu0 %v562
    %v926 = vpop.f32.mrb[0].mxu0
    %v927 = vadd.f32 0.0, %v926
    %v928 = vpop.f32.mrb[0].mxu0
    %929 = vmatprep.mubr.f32.mxu0 0.0
    %930 = vmatmul.mubr.f32.gmra.mrb[0].mxu0 %v565
    %v931 = vpop.f32.mrb[0].mxu0
    %v932 = vadd.f32 0.0, %v931
    %v933 = vpop.f32.mrb[0].mxu0
    %934 = vmatprep.mubr.f32.mxu0 0.0
    %935 = vmatmul.mubr.f32.gmra.mrb[0].mxu0 %v568
    %v936 = vpop.f32.mrb[0].mxu0
    %v937 = vadd.f32 0.0, %v936
    %v938 = vpop.f32.mrb[0].mxu0
    %939 = vmatprep.mubr.f32.mxu0 0.0
    %940 = vmatmul.mubr.f32.gmra.mrb[0].mxu0 %v571
    %v941 = vpop.f32.mrb[0].mxu0
    %v942 = vadd.f32 0.0, %v941
    %v943 = vpop.f32.mrb[0].mxu0
    %944 = vmatprep.mubr.f32.mxu0 0.0
    %945 = vmatmul.mubr.f32.gmra.mrb[0].mxu0 %v574
    %v946 = vpop.f32.mrb[0].mxu0
    %v947 = vadd.f32 0.0, %v946
    %v948 = vpop.f32.mrb[0].mxu0
    %949 = vdwg.mxu0
    %966 = vrot.lane.b32.xlu0 %v872, 2
    %v967 = vpop.permute.xlu0 %966
    %968 = vrot.lane.b32.xlu0 %v877, 2
    %v969 = vpop.permute.xlu0 %968
    %970 = vrot.lane.b32.xlu0 %v882, 2
    %v971 = vpop.permute.xlu0 %970
    %972 = vrot.lane.b32.xlu0 %v887, 2
    %v973 = vpop.permute.xlu0 %972
    %974 = vrot.lane.b32.xlu0 %v892, 2
    %v975 = vpop.permute.xlu0 %974
    %976 = vrot.lane.b32.xlu0 %v897, 2
    %v977 = vpop.permute.xlu0 %976
    %978 = vrot.lane.b32.xlu0 %v902, 2
    %v979 = vpop.permute.xlu0 %978
    %980 = vrot.lane.b32.xlu0 %v907, 2
    %v981 = vpop.permute.xlu0 %980
    %982 = vrot.lane.b32.xlu0 %v912, 2
    %v983 = vpop.permute.xlu0 %982
    %984 = vrot.lane.b32.xlu0 %v917, 2
    %v985 = vpop.permute.xlu0 %984
    %986 = vrot.lane.b32.xlu0 %v922, 2
    %v987 = vpop.permute.xlu0 %986
    %988 = vrot.lane.b32.xlu0 %v927, 2
    %v989 = vpop.permute.xlu0 %988
    %990 = vrot.lane.b32.xlu0 %v932, 2
    %v991 = vpop.permute.xlu0 %990
    %992 = vrot.lane.b32.xlu0 %v937, 2
    %v993 = vpop.permute.xlu0 %992
    %994 = vrot.lane.b32.xlu0 %v942, 2
    %v995 = vpop.permute.xlu0 %994
    %996 = vrot.lane.b32.xlu0 %v947, 2
    %v997 = vpop.permute.xlu0 %996
    %v1014 = vadd.f32 %v449, %v967
    %v1015 = vadd.f32 %v454, %v969
    %v1016 = vadd.f32 %v459, %v971
    %v1017 = vadd.f32 %v464, %v973
    %v1018 = vadd.f32 %v469, %v975
    %v1019 = vadd.f32 %v474, %v977
    %v1020 = vadd.f32 %v479, %v979
    %v1021 = vadd.f32 %v484, %v981
    %v1022 = vadd.f32 %v489, %v983
    %v1023 = vadd.f32 %v494, %v985
    %v1024 = vadd.f32 %v499, %v987
    %v1025 = vadd.f32 %v504, %v989
    %v1026 = vadd.f32 %v509, %v991
    %v1027 = vadd.f32 %v514, %v993
    %v1028 = vadd.f32 %v519, %v995
    %v1029 = vadd.f32 %v524, %v997
    %v1030 = vtanh.pop %v1014
    %v1031 = vtanh.pop %v1015
    %v1032 = vtanh.pop %v1016
    %v1033 = vtanh.pop %v1017
    %v1034 = vtanh.pop %v1018
    %v1035 = vtanh.pop %v1019
    %v1036 = vtanh.pop %v1020
    %v1037 = vtanh.pop %v1021
    %v1038 = vtanh.pop %v1022
    %v1039 = vtanh.pop %v1023
    %v1040 = vtanh.pop %v1024
    %v1041 = vtanh.pop %v1025
    %v1042 = vtanh.pop %v1026
    %v1043 = vtanh.pop %v1027
    %v1044 = vtanh.pop %v1028
    %v1045 = vtanh.pop %v1029
    %v1046 = vmul.f32 %v1030, %v92
    %v1047 = vmul.f32 %v1031, %v93
    %v1048 = vmul.f32 %v1032, %v94
    %v1049 = vmul.f32 %v1033, %v95
    %v1050 = vmul.f32 %v1034, %v96
    %v1051 = vmul.f32 %v1035, %v97
    %v1052 = vmul.f32 %v1036, %v98
    %v1053 = vmul.f32 %v1037, %v99
    %v1054 = vmul.f32 %v1038, %v100
    %v1055 = vmul.f32 %v1039, %v101
    %v1056 = vmul.f32 %v1040, %v102
    %v1057 = vmul.f32 %v1041, %v103
    %v1058 = vmul.f32 %v1042, %v104
    %v1059 = vmul.f32 %v1043, %v105
    %v1060 = vmul.f32 %v1044, %v106
    %v1061 = vmul.f32 %v1045, %v107
    %v1062 = vadd.f32 %v1046, %v108
    %v1063 = vadd.f32 %v1047, %v109
    %v1064 = vadd.f32 %v1048, %v110
    %v1065 = vadd.f32 %v1049, %v111
    %v1066 = vadd.f32 %v1050, %v112
    %v1067 = vadd.f32 %v1051, %v113
    %v1068 = vadd.f32 %v1052, %v114
    %v1069 = vadd.f32 %v1053, %v115
    %v1070 = vadd.f32 %v1054, %v116
    %v1071 = vadd.f32 %v1055, %v117
    %v1072 = vadd.f32 %v1056, %v118
    %v1073 = vadd.f32 %v1057, %v119
    %v1074 = vadd.f32 %v1058, %v120
    %v1075 = vadd.f32 %v1059, %v121
    %v1076 = vadd.f32 %v1060, %v122
    %v1077 = vadd.f32 %v1061, %v123
    %1082 = vrot.lane.b32.xlu0 %v793, 2
    %v1083 = vpop.permute.xlu0 %1082
    %1084 = vrot.lane.b32.xlu0 %v794, 2
    %v1085 = vpop.permute.xlu0 %1084
    %1086 = vrot.lane.b32.xlu0 %v795, 2
    %v1087 = vpop.permute.xlu0 %1086
    %1088 = vrot.lane.b32.xlu0 %v796, 2
    %v1089 = vpop.permute.xlu0 %1088
    %v1094 = vmul.f32 %v1066, %v1083
    %v1095 = vmul.f32 %v1067, %v1085
    %v1096 = vmul.f32 %v1068, %v1087
    %v1097 = vmul.f32 %v1069, %v1089
    %v1098 = vmul.f32 %v1062, %v1070
    %v1099 = vmul.f32 %v1063, %v1071
    %v1100 = vmul.f32 %v1064, %v1072
    %v1101 = vmul.f32 %v1065, %v1073
    %v1102 = vadd.f32 %v1094, %v1098
    %v1103 = vadd.f32 %v1095, %v1099
    %v1104 = vadd.f32 %v1096, %v1100
    %v1105 = vadd.f32 %v1097, %v1101
    %v1106 = vtanh.pop %v1102
    %v1107 = vtanh.pop %v1103
    %v1108 = vtanh.pop %v1104
    %v1109 = vtanh.pop %v1105
    %v1110 = vmul.f32 %v1074, %v1106
    %v1111 = vmul.f32 %v1075, %v1107
    %v1112 = vmul.f32 %v1076, %v1108
    %v1113 = vmul.f32 %v1077, %v1109
    %1118 = vrot.lane.b32.xlu0 %v1110, 126
    %v1119 = vpop.permute.xlu0 %1118
    %1120 = vrot.lane.b32.xlu0 %v1111, 126
    %v1121 = vpop.permute.xlu0 %1120
    %1122 = vrot.lane.b32.xlu0 %v1112, 126
    %v1123 = vpop.permute.xlu0 %1122
    %1124 = vrot.lane.b32.xlu0 %v1113, 126
    %v1125 = vpop.permute.xlu0 %1124
    %1130 = vmatprep.subr.mxu0 0.0
    %1131 = vmatpush1.msra.mxu0 %v1119
    %1132 = vmatprep.subr.mxu0 0.0
    %1133 = vmatpush1.msra.mxu0 %v1121
    %1134 = vmatprep.subr.mxu0 0.0
    %1135 = vmatpush1.msra.mxu0 %v1123
    %1136 = vmatprep.subr.mxu0 0.0
    %1137 = vmatpush1.msra.mxu0 %v1125
    %1138 = vmatprep.subr.mxu0 0.0
    %1139 = vmatpush1.msra.mxu0 0.0
    %1140 = vmatprep.subr.mxu0 0.0
    %1141 = vmatpush1.msra.mxu0 0.0
    %1142 = vmatprep.subr.mxu0 0.0
    %1143 = vmatpush1.msra.mxu0 0.0
    %1144 = vmatprep.subr.mxu0 0.0
    %1145 = vmatpush1.msra.mxu0 0.0
    %1146 = vmatprep.subr.mxu0 0.0
    %1147 = vmatpush1.msra.mxu0 0.0
    %1148 = vmatprep.subr.mxu0 0.0
    %1149 = vmatpush1.msra.mxu0 0.0
    %1150 = vmatprep.subr.mxu0 0.0
    %1151 = vmatpush1.msra.mxu0 0.0
    %1152 = vmatprep.subr.mxu0 0.0
    %1153 = vmatpush1.msra.mxu0 0.0
    %1154 = vmatprep.subr.mxu0 0.0
    %1155 = vmatpush1.msra.mxu0 0.0
    %1156 = vmatprep.subr.mxu0 0.0
    %1157 = vmatpush1.msra.mxu0 0.0
    %1158 = vmatprep.subr.mxu0 0.0
    %1159 = vmatpush1.msra.mxu0 0.0
    %1160 = vmatprep.subr.mxu0 0.0
    %1161 = vmatpush1.msra.mxu0 0.0
    %1162 = vmatprep.subr.mxu0 0.0
    %1163 = vmatpush1.msra.mxu0 0.0
    %1164 = vmatprep.subr.mxu0 0.0
    %1165 = vmatpush1.msra.mxu0 0.0
    %1166 = vmatprep.subr.mxu0 0.0
    %1167 = vmatpush1.msra.mxu0 0.0
    %1168 = vmatprep.subr.mxu0 0.0
    %1169 = vmatpush1.msra.mxu0 0.0
    %1170 = vmatprep.subr.mxu0 0.0
    %1171 = vmatpush1.msra.mxu0 0.0
    %1172 = vmatprep.subr.mxu0 0.0
    %1173 = vmatpush1.msra.mxu0 0.0
    %1174 = vmatprep.subr.mxu0 0.0
    %1175 = vmatpush1.msra.mxu0 0.0
    %1176 = vmatprep.subr.mxu0 0.0
    %1177 = vmatpush1.msra.mxu0 0.0
    %1178 = vmatprep.subr.mxu0 0.0
    %1179 = vmatpush1.msra.mxu0 0.0
    %1180 = vmatprep.subr.mxu0 0.0
    %1181 = vmatpush1.msra.mxu0 0.0
    %1182 = vmatprep.subr.mxu0 0.0
    %1183 = vmatpush1.msra.mxu0 0.0
    %1184 = vmatprep.subr.mxu0 0.0
    %1185 = vmatpush1.msra.mxu0 0.0
    %1186 = vmatprep.subr.mxu0 0.0
    %1187 = vmatpush1.msra.mxu0 0.0
    %1188 = vmatprep.subr.mxu0 0.0
    %1189 = vmatpush1.msra.mxu0 0.0
    %1190 = vmatprep.subr.mxu0 0.0
    %1191 = vmatpush1.msra.mxu0 0.0
    %1192 = vmatprep.subr.mxu0 0.0
    %1193 = vmatpush1.msra.mxu0 0.0
    %1194 = vmatprep.mubr.f32.mxu0 0.0
    %1195 = vmatmul.mubr.f32.gmra.mrb[0].mxu0 %v529
    %v1196 = vpop.f32.mrb[0].mxu0
    %v1197 = vadd.f32 0.0, %v1196
    %v1198 = vpop.f32.mrb[0].mxu0
    %1199 = vmatprep.mubr.f32.mxu0 0.0
    %1200 = vmatmul.mubr.f32.gmra.mrb[0].mxu0 %v532
    %v1201 = vpop.f32.mrb[0].mxu0
    %v1202 = vadd.f32 0.0, %v1201
    %v1203 = vpop.f32.mrb[0].mxu0
    %1204 = vmatprep.mubr.f32.mxu0 0.0
    %1205 = vmatmul.mubr.f32.gmra.mrb[0].mxu0 %v535
    %v1206 = vpop.f32.mrb[0].mxu0
    %v1207 = vadd.f32 0.0, %v1206
    %v1208 = vpop.f32.mrb[0].mxu0
    %1209 = vmatprep.mubr.f32.mxu0 0.0
    %1210 = vmatmul.mubr.f32.gmra.mrb[0].mxu0 %v538
    %v1211 = vpop.f32.mrb[0].mxu0
    %v1212 = vadd.f32 0.0, %v1211
    %v1213 = vpop.f32.mrb[0].mxu0
    %1214 = vmatprep.mubr.f32.mxu0 0.0
    %1215 = vmatmul.mubr.f32.gmra.mrb[0].mxu0 %v541
    %v1216 = vpop.f32.mrb[0].mxu0
    %v1217 = vadd.f32 0.0, %v1216
    %v1218 = vpop.f32.mrb[0].mxu0
    %1219 = vmatprep.mubr.f32.mxu0 0.0
    %1220 = vmatmul.mubr.f32.gmra.mrb[0].mxu0 %v544
    %v1221 = vpop.f32.mrb[0].mxu0
    %v1222 = vadd.f32 0.0, %v1221
    %v1223 = vpop.f32.mrb[0].mxu0
    %1224 = vmatprep.mubr.f32.mxu0 0.0
    %1225 = vmatmul.mubr.f32.gmra.mrb[0].mxu0 %v547
    %v1226 = vpop.f32.mrb[0].mxu0
    %v1227 = vadd.f32 0.0, %v1226
    %v1228 = vpop.f32.mrb[0].mxu0
    %1229 = vmatprep.mubr.f32.mxu0 0.0
    %1230 = vmatmul.mubr.f32.gmra.mrb[0].mxu0 %v550
    %v1231 = vpop.f32.mrb[0].mxu0
    %v1232 = vadd.f32 0.0, %v1231
    %v1233 = vpop.f32.mrb[0].mxu0
    %1234 = vmatprep.mubr.f32.mxu0 0.0
    %1235 = vmatmul.mubr.f32.gmra.mrb[0].mxu0 %v553
    %v1236 = vpop.f32.mrb[0].mxu0
    %v1237 = vadd.f32 0.0, %v1236
    %v1238 = vpop.f32.mrb[0].mxu0
    %1239 = vmatprep.mubr.f32.mxu0 0.0
    %1240 = vmatmul.mubr.f32.gmra.mrb[0].mxu0 %v556
    %v1241 = vpop.f32.mrb[0].mxu0
    %v1242 = vadd.f32 0.0, %v1241
    %v1243 = vpop.f32.mrb[0].mxu0
    %1244 = vmatprep.mubr.f32.mxu0 0.0
    %1245 = vmatmul.mubr.f32.gmra.mrb[0].mxu0 %v559
    %v1246 = vpop.f32.mrb[0].mxu0
    %v1247 = vadd.f32 0.0, %v1246
    %v1248 = vpop.f32.mrb[0].mxu0
    %1249 = vmatprep.mubr.f32.mxu0 0.0
    %1250 = vmatmul.mubr.f32.gmra.mrb[0].mxu0 %v562
    %v1251 = vpop.f32.mrb[0].mxu0
    %v1252 = vadd.f32 0.0, %v1251
    %v1253 = vpop.f32.mrb[0].mxu0
    %1254 = vmatprep.mubr.f32.mxu0 0.0
    %1255 = vmatmul.mubr.f32.gmra.mrb[0].mxu0 %v565
    %v1256 = vpop.f32.mrb[0].mxu0
    %v1257 = vadd.f32 0.0, %v1256
    %v1258 = vpop.f32.mrb[0].mxu0
    %1259 = vmatprep.mubr.f32.mxu0 0.0
    %1260 = vmatmul.mubr.f32.gmra.mrb[0].mxu0 %v568
    %v1261 = vpop.f32.mrb[0].mxu0
    %v1262 = vadd.f32 0.0, %v1261
    %v1263 = vpop.f32.mrb[0].mxu0
    %1264 = vmatprep.mubr.f32.mxu0 0.0
    %1265 = vmatmul.mubr.f32.gmra.mrb[0].mxu0 %v571
    %v1266 = vpop.f32.mrb[0].mxu0
    %v1267 = vadd.f32 0.0, %v1266
    %v1268 = vpop.f32.mrb[0].mxu0
    %1269 = vmatprep.mubr.f32.mxu0 0.0
    %1270 = vmatmul.mubr.f32.gmra.mrb[0].mxu0 %v574
    %v1271 = vpop.f32.mrb[0].mxu0
    %v1272 = vadd.f32 0.0, %v1271
    %v1273 = vpop.f32.mrb[0].mxu0
    %1274 = vdwg.mxu0
    %1291 = vrot.lane.b32.xlu0 %v1197, 4
    %v1292 = vpop.permute.xlu0 %1291
    %1293 = vrot.lane.b32.xlu0 %v1202, 4
    %v1294 = vpop.permute.xlu0 %1293
    %1295 = vrot.lane.b32.xlu0 %v1207, 4
    %v1296 = vpop.permute.xlu0 %1295
    %1297 = vrot.lane.b32.xlu0 %v1212, 4
    %v1298 = vpop.permute.xlu0 %1297
    %1299 = vrot.lane.b32.xlu0 %v1217, 4
    %v1300 = vpop.permute.xlu0 %1299
    %1301 = vrot.lane.b32.xlu0 %v1222, 4
    %v1302 = vpop.permute.xlu0 %1301
    %1303 = vrot.lane.b32.xlu0 %v1227, 4
    %v1304 = vpop.permute.xlu0 %1303
    %1305 = vrot.lane.b32.xlu0 %v1232, 4
    %v1306 = vpop.permute.xlu0 %1305
    %1307 = vrot.lane.b32.xlu0 %v1237, 4
    %v1308 = vpop.permute.xlu0 %1307
    %1309 = vrot.lane.b32.xlu0 %v1242, 4
    %v1310 = vpop.permute.xlu0 %1309
    %1311 = vrot.lane.b32.xlu0 %v1247, 4
    %v1312 = vpop.permute.xlu0 %1311
    %1313 = vrot.lane.b32.xlu0 %v1252, 4
    %v1314 = vpop.permute.xlu0 %1313
    %1315 = vrot.lane.b32.xlu0 %v1257, 4
    %v1316 = vpop.permute.xlu0 %1315
    %1317 = vrot.lane.b32.xlu0 %v1262, 4
    %v1318 = vpop.permute.xlu0 %1317
    %1319 = vrot.lane.b32.xlu0 %v1267, 4
    %v1320 = vpop.permute.xlu0 %1319
    %1321 = vrot.lane.b32.xlu0 %v1272, 4
    %v1322 = vpop.permute.xlu0 %1321
    %v1339 = vadd.f32 %v449, %v1292
    %v1340 = vadd.f32 %v454, %v1294
    %v1341 = vadd.f32 %v459, %v1296
    %v1342 = vadd.f32 %v464, %v1298
    %v1343 = vadd.f32 %v469, %v1300
    %v1344 = vadd.f32 %v474, %v1302
    %v1345 = vadd.f32 %v479, %v1304
    %v1346 = vadd.f32 %v484, %v1306
    %v1347 = vadd.f32 %v489, %v1308
    %v1348 = vadd.f32 %v494, %v1310
    %v1349 = vadd.f32 %v499, %v1312
    %v1350 = vadd.f32 %v504, %v1314
    %v1351 = vadd.f32 %v509, %v1316
    %v1352 = vadd.f32 %v514, %v1318
    %v1353 = vadd.f32 %v519, %v1320
    %v1354 = vadd.f32 %v524, %v1322
    %v1355 = vtanh.pop %v1339
    %v1356 = vtanh.pop %v1340
    %v1357 = vtanh.pop %v1341
    %v1358 = vtanh.pop %v1342
    %v1359 = vtanh.pop %v1343
    %v1360 = vtanh.pop %v1344
    %v1361 = vtanh.pop %v1345
    %v1362 = vtanh.pop %v1346
    %v1363 = vtanh.pop %v1347
    %v1364 = vtanh.pop %v1348
    %v1365 = vtanh.pop %v1349
    %v1366 = vtanh.pop %v1350
    %v1367 = vtanh.pop %v1351
    %v1368 = vtanh.pop %v1352
    %v1369 = vtanh.pop %v1353
    %v1370 = vtanh.pop %v1354
    %v1371 = vmul.f32 %v1355, %v92
    %v1372 = vmul.f32 %v1356, %v93
    %v1373 = vmul.f32 %v1357, %v94
    %v1374 = vmul.f32 %v1358, %v95
    %v1375 = vmul.f32 %v1359, %v96
    %v1376 = vmul.f32 %v1360, %v97
    %v1377 = vmul.f32 %v1361, %v98
    %v1378 = vmul.f32 %v1362, %v99
    %v1379 = vmul.f32 %v1363, %v100
    %v1380 = vmul.f32 %v1364, %v101
    %v1381 = vmul.f32 %v1365, %v102
    %v1382 = vmul.f32 %v1366, %v103
    %v1383 = vmul.f32 %v1367, %v104
    %v1384 = vmul.f32 %v1368, %v105
    %v1385 = vmul.f32 %v1369, %v106
    %v1386 = vmul.f32 %v1370, %v107
    %v1387 = vadd.f32 %v1371, %v108
    %v1388 = vadd.f32 %v1372, %v109
    %v1389 = vadd.f32 %v1373, %v110
    %v1390 = vadd.f32 %v1374, %v111
    %v1391 = vadd.f32 %v1375, %v112
    %v1392 = vadd.f32 %v1376, %v113
    %v1393 = vadd.f32 %v1377, %v114
    %v1394 = vadd.f32 %v1378, %v115
    %v1395 = vadd.f32 %v1379, %v116
    %v1396 = vadd.f32 %v1380, %v117
    %v1397 = vadd.f32 %v1381, %v118
    %v1398 = vadd.f32 %v1382, %v119
    %v1399 = vadd.f32 %v1383, %v120
    %v1400 = vadd.f32 %v1384, %v121
    %v1401 = vadd.f32 %v1385, %v122
    %v1402 = vadd.f32 %v1386, %v123
    %1407 = vrot.lane.b32.xlu0 %v1102, 2
    %v1408 = vpop.permute.xlu0 %1407
    %1409 = vrot.lane.b32.xlu0 %v1103, 2
    %v1410 = vpop.permute.xlu0 %1409
    %1411 = vrot.lane.b32.xlu0 %v1104, 2
    %v1412 = vpop.permute.xlu0 %1411
    %1413 = vrot.lane.b32.xlu0 %v1105, 2
    %v1414 = vpop.permute.xlu0 %1413
    %v1419 = vmul.f32 %v1391, %v1408
    %v1420 = vmul.f32 %v1392, %v1410
    %v1421 = vmul.f32 %v1393, %v1412
    %v1422 = vmul.f32 %v1394, %v1414
    %v1423 = vmul.f32 %v1387, %v1395
    %v1424 = vmul.f32 %v1388, %v1396
    %v1425 = vmul.f32 %v1389, %v1397
    %v1426 = vmul.f32 %v1390, %v1398
    %v1427 = vadd.f32 %v1419, %v1423
    %v1428 = vadd.f32 %v1420, %v1424
    %v1429 = vadd.f32 %v1421, %v1425
    %v1430 = vadd.f32 %v1422, %v1426
    %v1431 = vtanh.pop %v1427
    %v1432 = vtanh.pop %v1428
    %v1433 = vtanh.pop %v1429
    %v1434 = vtanh.pop %v1430
    %v1435 = vmul.f32 %v1399, %v1431
    %v1436 = vmul.f32 %v1400, %v1432
    %v1437 = vmul.f32 %v1401, %v1433
    %v1438 = vmul.f32 %v1402, %v1434
    %1443 = vrot.lane.b32.xlu0 %v1435, 124
    %v1444 = vpop.permute.xlu0 %1443
    %1445 = vrot.lane.b32.xlu0 %v1436, 124
    %v1446 = vpop.permute.xlu0 %1445
    %1447 = vrot.lane.b32.xlu0 %v1437, 124
    %v1448 = vpop.permute.xlu0 %1447
    %1449 = vrot.lane.b32.xlu0 %v1438, 124
    %v1450 = vpop.permute.xlu0 %1449
    %1455 = vmatprep.subr.mxu0 0.0
    %1456 = vmatpush1.msra.mxu0 %v1444
    %1457 = vmatprep.subr.mxu0 0.0
    %1458 = vmatpush1.msra.mxu0 %v1446
    %1459 = vmatprep.subr.mxu0 0.0
    %1460 = vmatpush1.msra.mxu0 %v1448
    %1461 = vmatprep.subr.mxu0 0.0
    %1462 = vmatpush1.msra.mxu0 %v1450
    %1463 = vmatprep.subr.mxu0 0.0
    %1464 = vmatpush1.msra.mxu0 0.0
    %1465 = vmatprep.subr.mxu0 0.0
    %1466 = vmatpush1.msra.mxu0 0.0
    %1467 = vmatprep.subr.mxu0 0.0
    %1468 = vmatpush1.msra.mxu0 0.0
    %1469 = vmatprep.subr.mxu0 0.0
    %1470 = vmatpush1.msra.mxu0 0.0
    %1471 = vmatprep.subr.mxu0 0.0
    %1472 = vmatpush1.msra.mxu0 0.0
    %1473 = vmatprep.subr.mxu0 0.0
    %1474 = vmatpush1.msra.mxu0 0.0
    %1475 = vmatprep.subr.mxu0 0.0
    %1476 = vmatpush1.msra.mxu0 0.0
    %1477 = vmatprep.subr.mxu0 0.0
    %1478 = vmatpush1.msra.mxu0 0.0
    %1479 = vmatprep.subr.mxu0 0.0
    %1480 = vmatpush1.msra.mxu0 0.0
    %1481 = vmatprep.subr.mxu0 0.0
    %1482 = vmatpush1.msra.mxu0 0.0
    %1483 = vmatprep.subr.mxu0 0.0
    %1484 = vmatpush1.msra.mxu0 0.0
    %1485 = vmatprep.subr.mxu0 0.0
    %1486 = vmatpush1.msra.mxu0 0.0
    %1487 = vmatprep.subr.mxu0 0.0
    %1488 = vmatpush1.msra.mxu0 0.0
    %1489 = vmatprep.subr.mxu0 0.0
    %1490 = vmatpush1.msra.mxu0 0.0
    %1491 = vmatprep.subr.mxu0 0.0
    %1492 = vmatpush1.msra.mxu0 0.0
    %1493 = vmatprep.subr.mxu0 0.0
    %1494 = vmatpush1.msra.mxu0 0.0
    %1495 = vmatprep.subr.mxu0 0.0
    %1496 = vmatpush1.msra.mxu0 0.0
    %1497 = vmatprep.subr.mxu0 0.0
    %1498 = vmatpush1.msra.mxu0 0.0
    %1499 = vmatprep.subr.mxu0 0.0
    %1500 = vmatpush1.msra.mxu0 0.0
    %1501 = vmatprep.subr.mxu0 0.0
    %1502 = vmatpush1.msra.mxu0 0.0
    %1503 = vmatprep.subr.mxu0 0.0
    %1504 = vmatpush1.msra.mxu0 0.0
    %1505 = vmatprep.subr.mxu0 0.0
    %1506 = vmatpush1.msra.mxu0 0.0
    %1507 = vmatprep.subr.mxu0 0.0
    %1508 = vmatpush1.msra.mxu0 0.0
    %1509 = vmatprep.subr.mxu0 0.0
    %1510 = vmatpush1.msra.mxu0 0.0
    %1511 = vmatprep.subr.mxu0 0.0
    %1512 = vmatpush1.msra.mxu0 0.0
    %1513 = vmatprep.subr.mxu0 0.0
    %1514 = vmatpush1.msra.mxu0 0.0
    %1515 = vmatprep.subr.mxu0 0.0
    %1516 = vmatpush1.msra.mxu0 0.0
    %1517 = vmatprep.subr.mxu0 0.0
    %1518 = vmatpush1.msra.mxu0 0.0
    %1519 = vmatprep.mubr.f32.mxu0 0.0
    %1520 = vmatmul.mubr.f32.gmra.mrb[0].mxu0 %v529
    %v1521 = vpop.f32.mrb[0].mxu0
    %v1522 = vadd.f32 0.0, %v1521
    %v1523 = vpop.f32.mrb[0].mxu0
    %1524 = vmatprep.mubr.f32.mxu0 0.0
    %1525 = vmatmul.mubr.f32.gmra.mrb[0].mxu0 %v532
    %v1526 = vpop.f32.mrb[0].mxu0
    %v1527 = vadd.f32 0.0, %v1526
    %v1528 = vpop.f32.mrb[0].mxu0
    %1529 = vmatprep.mubr.f32.mxu0 0.0
    %1530 = vmatmul.mubr.f32.gmra.mrb[0].mxu0 %v535
    %v1531 = vpop.f32.mrb[0].mxu0
    %v1532 = vadd.f32 0.0, %v1531
    %v1533 = vpop.f32.mrb[0].mxu0
    %1534 = vmatprep.mubr.f32.mxu0 0.0
    %1535 = vmatmul.mubr.f32.gmra.mrb[0].mxu0 %v538
    %v1536 = vpop.f32.mrb[0].mxu0
    %v1537 = vadd.f32 0.0, %v1536
    %v1538 = vpop.f32.mrb[0].mxu0
    %1539 = vmatprep.mubr.f32.mxu0 0.0
    %1540 = vmatmul.mubr.f32.gmra.mrb[0].mxu0 %v541
    %v1541 = vpop.f32.mrb[0].mxu0
    %v1542 = vadd.f32 0.0, %v1541
    %v1543 = vpop.f32.mrb[0].mxu0
    %1544 = vmatprep.mubr.f32.mxu0 0.0
    %1545 = vmatmul.mubr.f32.gmra.mrb[0].mxu0 %v544
    %v1546 = vpop.f32.mrb[0].mxu0
    %v1547 = vadd.f32 0.0, %v1546
    %v1548 = vpop.f32.mrb[0].mxu0
    %1549 = vmatprep.mubr.f32.mxu0 0.0
    %1550 = vmatmul.mubr.f32.gmra.mrb[0].mxu0 %v547
    %v1551 = vpop.f32.mrb[0].mxu0
    %v1552 = vadd.f32 0.0, %v1551
    %v1553 = vpop.f32.mrb[0].mxu0
    %1554 = vmatprep.mubr.f32.mxu0 0.0
    %1555 = vmatmul.mubr.f32.gmra.mrb[0].mxu0 %v550
    %v1556 = vpop.f32.mrb[0].mxu0
    %v1557 = vadd.f32 0.0, %v1556
    %v1558 = vpop.f32.mrb[0].mxu0
    %1559 = vmatprep.mubr.f32.mxu0 0.0
    %1560 = vmatmul.mubr.f32.gmra.mrb[0].mxu0 %v553
    %v1561 = vpop.f32.mrb[0].mxu0
    %v1562 = vadd.f32 0.0, %v1561
    %v1563 = vpop.f32.mrb[0].mxu0
    %1564 = vmatprep.mubr.f32.mxu0 0.0
    %1565 = vmatmul.mubr.f32.gmra.mrb[0].mxu0 %v556
    %v1566 = vpop.f32.mrb[0].mxu0
    %v1567 = vadd.f32 0.0, %v1566
    %v1568 = vpop.f32.mrb[0].mxu0
    %1569 = vmatprep.mubr.f32.mxu0 0.0
    %1570 = vmatmul.mubr.f32.gmra.mrb[0].mxu0 %v559
    %v1571 = vpop.f32.mrb[0].mxu0
    %v1572 = vadd.f32 0.0, %v1571
    %v1573 = vpop.f32.mrb[0].mxu0
    %1574 = vmatprep.mubr.f32.mxu0 0.0
    %1575 = vmatmul.mubr.f32.gmra.mrb[0].mxu0 %v562
    %v1576 = vpop.f32.mrb[0].mxu0
    %v1577 = vadd.f32 0.0, %v1576
    %v1578 = vpop.f32.mrb[0].mxu0
    %1579 = vmatprep.mubr.f32.mxu0 0.0
    %1580 = vmatmul.mubr.f32.gmra.mrb[0].mxu0 %v565
    %v1581 = vpop.f32.mrb[0].mxu0
    %v1582 = vadd.f32 0.0, %v1581
    %v1583 = vpop.f32.mrb[0].mxu0
    %1584 = vmatprep.mubr.f32.mxu0 0.0
    %1585 = vmatmul.mubr.f32.gmra.mrb[0].mxu0 %v568
    %v1586 = vpop.f32.mrb[0].mxu0
    %v1587 = vadd.f32 0.0, %v1586
    %v1588 = vpop.f32.mrb[0].mxu0
    %1589 = vmatprep.mubr.f32.mxu0 0.0
    %1590 = vmatmul.mubr.f32.gmra.mrb[0].mxu0 %v571
    %v1591 = vpop.f32.mrb[0].mxu0
    %v1592 = vadd.f32 0.0, %v1591
    %v1593 = vpop.f32.mrb[0].mxu0
    %1594 = vmatprep.mubr.f32.mxu0 0.0
    %1595 = vmatmul.mubr.f32.gmra.mrb[0].mxu0 %v574
    %v1596 = vpop.f32.mrb[0].mxu0
    %v1597 = vadd.f32 0.0, %v1596
    %v1598 = vpop.f32.mrb[0].mxu0
    %1599 = vdwg.mxu0
    %1616 = vrot.lane.b32.xlu0 %v1522, 6
    %v1617 = vpop.permute.xlu0 %1616
    %1618 = vrot.lane.b32.xlu0 %v1527, 6
    %v1619 = vpop.permute.xlu0 %1618
    %1620 = vrot.lane.b32.xlu0 %v1532, 6
    %v1621 = vpop.permute.xlu0 %1620
    %1622 = vrot.lane.b32.xlu0 %v1537, 6
    %v1623 = vpop.permute.xlu0 %1622
    %1624 = vrot.lane.b32.xlu0 %v1542, 6
    %v1625 = vpop.permute.xlu0 %1624
    %1626 = vrot.lane.b32.xlu0 %v1547, 6
    %v1627 = vpop.permute.xlu0 %1626
    %1628 = vrot.lane.b32.xlu0 %v1552, 6
    %v1629 = vpop.permute.xlu0 %1628
    %1630 = vrot.lane.b32.xlu0 %v1557, 6
    %v1631 = vpop.permute.xlu0 %1630
    %1632 = vrot.lane.b32.xlu0 %v1562, 6
    %v1633 = vpop.permute.xlu0 %1632
    %1634 = vrot.lane.b32.xlu0 %v1567, 6
    %v1635 = vpop.permute.xlu0 %1634
    %1636 = vrot.lane.b32.xlu0 %v1572, 6
    %v1637 = vpop.permute.xlu0 %1636
    %1638 = vrot.lane.b32.xlu0 %v1577, 6
    %v1639 = vpop.permute.xlu0 %1638
    %1640 = vrot.lane.b32.xlu0 %v1582, 6
    %v1641 = vpop.permute.xlu0 %1640
    %1642 = vrot.lane.b32.xlu0 %v1587, 6
    %v1643 = vpop.permute.xlu0 %1642
    %1644 = vrot.lane.b32.xlu0 %v1592, 6
    %v1645 = vpop.permute.xlu0 %1644
    %1646 = vrot.lane.b32.xlu0 %v1597, 6
    %v1647 = vpop.permute.xlu0 %1646
    %v1664 = vadd.f32 %v449, %v1617
    %v1665 = vadd.f32 %v454, %v1619
    %v1666 = vadd.f32 %v459, %v1621
    %v1667 = vadd.f32 %v464, %v1623
    %v1668 = vadd.f32 %v469, %v1625
    %v1669 = vadd.f32 %v474, %v1627
    %v1670 = vadd.f32 %v479, %v1629
    %v1671 = vadd.f32 %v484, %v1631
    %v1672 = vadd.f32 %v489, %v1633
    %v1673 = vadd.f32 %v494, %v1635
    %v1674 = vadd.f32 %v499, %v1637
    %v1675 = vadd.f32 %v504, %v1639
    %v1676 = vadd.f32 %v509, %v1641
    %v1677 = vadd.f32 %v514, %v1643
    %v1678 = vadd.f32 %v519, %v1645
    %v1679 = vadd.f32 %v524, %v1647
    %v1680 = vtanh.pop %v1664
    %v1681 = vtanh.pop %v1665
    %v1682 = vtanh.pop %v1666
    %v1683 = vtanh.pop %v1667
    %v1684 = vtanh.pop %v1668
    %v1685 = vtanh.pop %v1669
    %v1686 = vtanh.pop %v1670
    %v1687 = vtanh.pop %v1671
    %v1688 = vtanh.pop %v1672
    %v1689 = vtanh.pop %v1673
    %v1690 = vtanh.pop %v1674
    %v1691 = vtanh.pop %v1675
    %v1692 = vtanh.pop %v1676
    %v1693 = vtanh.pop %v1677
    %v1694 = vtanh.pop %v1678
    %v1695 = vtanh.pop %v1679
    %v1696 = vmul.f32 %v1680, %v92
    %v1697 = vmul.f32 %v1681, %v93
    %v1698 = vmul.f32 %v1682, %v94
    %v1699 = vmul.f32 %v1683, %v95
    %v1700 = vmul.f32 %v1684, %v96
    %v1701 = vmul.f32 %v1685, %v97
    %v1702 = vmul.f32 %v1686, %v98
    %v1703 = vmul.f32 %v1687, %v99
    %v1704 = vmul.f32 %v1688, %v100
    %v1705 = vmul.f32 %v1689, %v101
    %v1706 = vmul.f32 %v1690, %v102
    %v1707 = vmul.f32 %v1691, %v103
    %v1708 = vmul.f32 %v1692, %v104
    %v1709 = vmul.f32 %v1693, %v105
    %v1710 = vmul.f32 %v1694, %v106
    %v1711 = vmul.f32 %v1695, %v107
    %v1712 = vadd.f32 %v1696, %v108
    %v1713 = vadd.f32 %v1697, %v109
    %v1714 = vadd.f32 %v1698, %v110
    %v1715 = vadd.f32 %v1699, %v111
    %v1716 = vadd.f32 %v1700, %v112
    %v1717 = vadd.f32 %v1701, %v113
    %v1718 = vadd.f32 %v1702, %v114
    %v1719 = vadd.f32 %v1703, %v115
    %v1720 = vadd.f32 %v1704, %v116
    %v1721 = vadd.f32 %v1705, %v117
    %v1722 = vadd.f32 %v1706, %v118
    %v1723 = vadd.f32 %v1707, %v119
    %v1724 = vadd.f32 %v1708, %v120
    %v1725 = vadd.f32 %v1709, %v121
    %v1726 = vadd.f32 %v1710, %v122
    %v1727 = vadd.f32 %v1711, %v123
    %1732 = vrot.lane.b32.xlu0 %v1427, 2
    %v1733 = vpop.permute.xlu0 %1732
    %1734 = vrot.lane.b32.xlu0 %v1428, 2
    %v1735 = vpop.permute.xlu0 %1734
    %1736 = vrot.lane.b32.xlu0 %v1429, 2
    %v1737 = vpop.permute.xlu0 %1736
    %1738 = vrot.lane.b32.xlu0 %v1430, 2
    %v1739 = vpop.permute.xlu0 %1738
    %v1744 = vmul.f32 %v1716, %v1733
    %v1745 = vmul.f32 %v1717, %v1735
    %v1746 = vmul.f32 %v1718, %v1737
    %v1747 = vmul.f32 %v1719, %v1739
    %v1748 = vmul.f32 %v1712, %v1720
    %v1749 = vmul.f32 %v1713, %v1721
    %v1750 = vmul.f32 %v1714, %v1722
    %v1751 = vmul.f32 %v1715, %v1723
    %v1752 = vadd.f32 %v1744, %v1748
    %v1753 = vadd.f32 %v1745, %v1749
    %v1754 = vadd.f32 %v1746, %v1750
    %v1755 = vadd.f32 %v1747, %v1751
    %v1756 = vtanh.pop %v1752
    %v1757 = vtanh.pop %v1753
    %v1758 = vtanh.pop %v1754
    %v1759 = vtanh.pop %v1755
    %v1760 = vmul.f32 %v1724, %v1756
    %v1761 = vmul.f32 %v1725, %v1757
    %v1762 = vmul.f32 %v1726, %v1758
    %v1763 = vmul.f32 %v1727, %v1759
    %1768 = vrot.lane.b32.xlu0 %v1760, 122
    %v1769 = vpop.permute.xlu0 %1768
    %1770 = vrot.lane.b32.xlu0 %v1761, 122
    %v1771 = vpop.permute.xlu0 %1770
    %1772 = vrot.lane.b32.xlu0 %v1762, 122
    %v1773 = vpop.permute.xlu0 %1772
    %1774 = vrot.lane.b32.xlu0 %v1763, 122
    %v1775 = vpop.permute.xlu0 %1774
    %1780 = vmatprep.subr.mxu0 0.0
    %1781 = vmatpush1.msra.mxu0 %v1769
    %1782 = vmatprep.subr.mxu0 0.0
    %1783 = vmatpush1.msra.mxu0 %v1771
    %1784 = vmatprep.subr.mxu0 0.0
    %1785 = vmatpush1.msra.mxu0 %v1773
    %1786 = vmatprep.subr.mxu0 0.0
    %1787 = vmatpush1.msra.mxu0 %v1775
    %1788 = vmatprep.subr.mxu0 0.0
    %1789 = vmatpush1.msra.mxu0 0.0
    %1790 = vmatprep.subr.mxu0 0.0
    %1791 = vmatpush1.msra.mxu0 0.0
    %1792 = vmatprep.subr.mxu0 0.0
    %1793 = vmatpush1.msra.mxu0 0.0
    %1794 = vmatprep.subr.mxu0 0.0
    %1795 = vmatpush1.msra.mxu0 0.0
    %1796 = vmatprep.subr.mxu0 0.0
    %1797 = vmatpush1.msra.mxu0 0.0
    %1798 = vmatprep.subr.mxu0 0.0
    %1799 = vmatpush1.msra.mxu0 0.0
    %1800 = vmatprep.subr.mxu0 0.0
    %1801 = vmatpush1.msra.mxu0 0.0
    %1802 = vmatprep.subr.mxu0 0.0
    %1803 = vmatpush1.msra.mxu0 0.0
    %1804 = vmatprep.subr.mxu0 0.0
    %1805 = vmatpush1.msra.mxu0 0.0
    %1806 = vmatprep.subr.mxu0 0.0
    %1807 = vmatpush1.msra.mxu0 0.0
    %1808 = vmatprep.subr.mxu0 0.0
    %1809 = vmatpush1.msra.mxu0 0.0
    %1810 = vmatprep.subr.mxu0 0.0
    %1811 = vmatpush1.msra.mxu0 0.0
    %1812 = vmatprep.subr.mxu0 0.0
    %1813 = vmatpush1.msra.mxu0 0.0
    %1814 = vmatprep.subr.mxu0 0.0
    %1815 = vmatpush1.msra.mxu0 0.0
    %1816 = vmatprep.subr.mxu0 0.0
    %1817 = vmatpush1.msra.mxu0 0.0
    %1818 = vmatprep.subr.mxu0 0.0
    %1819 = vmatpush1.msra.mxu0 0.0
    %1820 = vmatprep.subr.mxu0 0.0
    %1821 = vmatpush1.msra.mxu0 0.0
    %1822 = vmatprep.subr.mxu0 0.0
    %1823 = vmatpush1.msra.mxu0 0.0
    %1824 = vmatprep.subr.mxu0 0.0
    %1825 = vmatpush1.msra.mxu0 0.0
    %1826 = vmatprep.subr.mxu0 0.0
    %1827 = vmatpush1.msra.mxu0 0.0
    %1828 = vmatprep.subr.mxu0 0.0
    %1829 = vmatpush1.msra.mxu0 0.0
    %1830 = vmatprep.subr.mxu0 0.0
    %1831 = vmatpush1.msra.mxu0 0.0
    %1832 = vmatprep.subr.mxu0 0.0
    %1833 = vmatpush1.msra.mxu0 0.0
    %1834 = vmatprep.subr.mxu0 0.0
    %1835 = vmatpush1.msra.mxu0 0.0
    %1836 = vmatprep.subr.mxu0 0.0
    %1837 = vmatpush1.msra.mxu0 0.0
    %1838 = vmatprep.subr.mxu0 0.0
    %1839 = vmatpush1.msra.mxu0 0.0
    %1840 = vmatprep.subr.mxu0 0.0
    %1841 = vmatpush1.msra.mxu0 0.0
    %1842 = vmatprep.subr.mxu0 0.0
    %1843 = vmatpush1.msra.mxu0 0.0
    %1844 = vmatprep.mubr.f32.mxu0 0.0
    %1845 = vmatmul.mubr.f32.gmra.mrb[0].mxu0 %v529
    %v1846 = vpop.f32.mrb[0].mxu0
    %v1847 = vadd.f32 0.0, %v1846
    %v1848 = vpop.f32.mrb[0].mxu0
    %1849 = vmatprep.mubr.f32.mxu0 0.0
    %1850 = vmatmul.mubr.f32.gmra.mrb[0].mxu0 %v532
    %v1851 = vpop.f32.mrb[0].mxu0
    %v1852 = vadd.f32 0.0, %v1851
    %v1853 = vpop.f32.mrb[0].mxu0
    %1854 = vmatprep.mubr.f32.mxu0 0.0
    %1855 = vmatmul.mubr.f32.gmra.mrb[0].mxu0 %v535
    %v1856 = vpop.f32.mrb[0].mxu0
    %v1857 = vadd.f32 0.0, %v1856
    %v1858 = vpop.f32.mrb[0].mxu0
    %1859 = vmatprep.mubr.f32.mxu0 0.0
    %1860 = vmatmul.mubr.f32.gmra.mrb[0].mxu0 %v538
    %v1861 = vpop.f32.mrb[0].mxu0
    %v1862 = vadd.f32 0.0, %v1861
    %v1863 = vpop.f32.mrb[0].mxu0
    %1864 = vmatprep.mubr.f32.mxu0 0.0
    %1865 = vmatmul.mubr.f32.gmra.mrb[0].mxu0 %v541
    %v1866 = vpop.f32.mrb[0].mxu0
    %v1867 = vadd.f32 0.0, %v1866
    %v1868 = vpop.f32.mrb[0].mxu0
    %1869 = vmatprep.mubr.f32.mxu0 0.0
    %1870 = vmatmul.mubr.f32.gmra.mrb[0].mxu0 %v544
    %v1871 = vpop.f32.mrb[0].mxu0
    %v1872 = vadd.f32 0.0, %v1871
    %v1873 = vpop.f32.mrb[0].mxu0
    %1874 = vmatprep.mubr.f32.mxu0 0.0
    %1875 = vmatmul.mubr.f32.gmra.mrb[0].mxu0 %v547
    %v1876 = vpop.f32.mrb[0].mxu0
    %v1877 = vadd.f32 0.0, %v1876
    %v1878 = vpop.f32.mrb[0].mxu0
    %1879 = vmatprep.mubr.f32.mxu0 0.0
    %1880 = vmatmul.mubr.f32.gmra.mrb[0].mxu0 %v550
    %v1881 = vpop.f32.mrb[0].mxu0
    %v1882 = vadd.f32 0.0, %v1881
    %v1883 = vpop.f32.mrb[0].mxu0
    %1884 = vmatprep.mubr.f32.mxu0 0.0
    %1885 = vmatmul.mubr.f32.gmra.mrb[0].mxu0 %v553
    %v1886 = vpop.f32.mrb[0].mxu0
    %v1887 = vadd.f32 0.0, %v1886
    %v1888 = vpop.f32.mrb[0].mxu0
    %1889 = vmatprep.mubr.f32.mxu0 0.0
    %1890 = vmatmul.mubr.f32.gmra.mrb[0].mxu0 %v556
    %v1891 = vpop.f32.mrb[0].mxu0
    %v1892 = vadd.f32 0.0, %v1891
    %v1893 = vpop.f32.mrb[0].mxu0
    %1894 = vmatprep.mubr.f32.mxu0 0.0
    %1895 = vmatmul.mubr.f32.gmra.mrb[0].mxu0 %v559
    %v1896 = vpop.f32.mrb[0].mxu0
    %v1897 = vadd.f32 0.0, %v1896
    %v1898 = vpop.f32.mrb[0].mxu0
    %1899 = vmatprep.mubr.f32.mxu0 0.0
    %1900 = vmatmul.mubr.f32.gmra.mrb[0].mxu0 %v562
    %v1901 = vpop.f32.mrb[0].mxu0
    %v1902 = vadd.f32 0.0, %v1901
    %v1903 = vpop.f32.mrb[0].mxu0
    %1904 = vmatprep.mubr.f32.mxu0 0.0
    %1905 = vmatmul.mubr.f32.gmra.mrb[0].mxu0 %v565
    %v1906 = vpop.f32.mrb[0].mxu0
    %v1907 = vadd.f32 0.0, %v1906
    %v1908 = vpop.f32.mrb[0].mxu0
    %1909 = vmatprep.mubr.f32.mxu0 0.0
    %1910 = vmatmul.mubr.f32.gmra.mrb[0].mxu0 %v568
    %v1911 = vpop.f32.mrb[0].mxu0
    %v1912 = vadd.f32 0.0, %v1911
    %v1913 = vpop.f32.mrb[0].mxu0
    %1914 = vmatprep.mubr.f32.mxu0 0.0
    %1915 = vmatmul.mubr.f32.gmra.mrb[0].mxu0 %v571
    %v1916 = vpop.f32.mrb[0].mxu0
    %v1917 = vadd.f32 0.0, %v1916
    %v1918 = vpop.f32.mrb[0].mxu0
    %1919 = vmatprep.mubr.f32.mxu0 0.0
    %1920 = vmatmul.mubr.f32.gmra.mrb[0].mxu0 %v574
    %v1921 = vpop.f32.mrb[0].mxu0
    %v1922 = vadd.f32 0.0, %v1921
    %v1923 = vpop.f32.mrb[0].mxu0
    %1924 = vdwg.mxu0
    %1941 = vrot.lane.b32.xlu0 %v1847, 8
    %v1942 = vpop.permute.xlu0 %1941
    %1943 = vrot.lane.b32.xlu0 %v1852, 8
    %v1944 = vpop.permute.xlu0 %1943
    %1945 = vrot.lane.b32.xlu0 %v1857, 8
    %v1946 = vpop.permute.xlu0 %1945
    %1947 = vrot.lane.b32.xlu0 %v1862, 8
    %v1948 = vpop.permute.xlu0 %1947
    %1949 = vrot.lane.b32.xlu0 %v1867, 8
    %v1950 = vpop.permute.xlu0 %1949
    %1951 = vrot.lane.b32.xlu0 %v1872, 8
    %v1952 = vpop.permute.xlu0 %1951
    %1953 = vrot.lane.b32.xlu0 %v1877, 8
    %v1954 = vpop.permute.xlu0 %1953
    %1955 = vrot.lane.b32.xlu0 %v1882, 8
    %v1956 = vpop.permute.xlu0 %1955
    %1957 = vrot.lane.b32.xlu0 %v1887, 8
    %v1958 = vpop.permute.xlu0 %1957
    %1959 = vrot.lane.b32.xlu0 %v1892, 8
    %v1960 = vpop.permute.xlu0 %1959
    %1961 = vrot.lane.b32.xlu0 %v1897, 8
    %v1962 = vpop.permute.xlu0 %1961
    %1963 = vrot.lane.b32.xlu0 %v1902, 8
    %v1964 = vpop.permute.xlu0 %1963
    %1965 = vrot.lane.b32.xlu0 %v1907, 8
    %v1966 = vpop.permute.xlu0 %1965
    %1967 = vrot.lane.b32.xlu0 %v1912, 8
    %v1968 = vpop.permute.xlu0 %1967
    %1969 = vrot.lane.b32.xlu0 %v1917, 8
    %v1970 = vpop.permute.xlu0 %1969
    %1971 = vrot.lane.b32.xlu0 %v1922, 8
    %v1972 = vpop.permute.xlu0 %1971
    %v1989 = vadd.f32 %v449, %v1942
    %v1990 = vadd.f32 %v454, %v1944
    %v1991 = vadd.f32 %v459, %v1946
    %v1992 = vadd.f32 %v464, %v1948
    %v1993 = vadd.f32 %v469, %v1950
    %v1994 = vadd.f32 %v474, %v1952
    %v1995 = vadd.f32 %v479, %v1954
    %v1996 = vadd.f32 %v484, %v1956
    %v1997 = vadd.f32 %v489, %v1958
    %v1998 = vadd.f32 %v494, %v1960
    %v1999 = vadd.f32 %v499, %v1962
    %v2000 = vadd.f32 %v504, %v1964
    %v2001 = vadd.f32 %v509, %v1966
    %v2002 = vadd.f32 %v514, %v1968
    %v2003 = vadd.f32 %v519, %v1970
    %v2004 = vadd.f32 %v524, %v1972
    %v2005 = vtanh.pop %v1989
    %v2006 = vtanh.pop %v1990
    %v2007 = vtanh.pop %v1991
    %v2008 = vtanh.pop %v1992
    %v2009 = vtanh.pop %v1993
    %v2010 = vtanh.pop %v1994
    %v2011 = vtanh.pop %v1995
    %v2012 = vtanh.pop %v1996
    %v2013 = vtanh.pop %v1997
    %v2014 = vtanh.pop %v1998
    %v2015 = vtanh.pop %v1999
    %v2016 = vtanh.pop %v2000
    %v2017 = vtanh.pop %v2001
    %v2018 = vtanh.pop %v2002
    %v2019 = vtanh.pop %v2003
    %v2020 = vtanh.pop %v2004
    %v2021 = vmul.f32 %v2005, %v92
    %v2022 = vmul.f32 %v2006, %v93
    %v2023 = vmul.f32 %v2007, %v94
    %v2024 = vmul.f32 %v2008, %v95
    %v2025 = vmul.f32 %v2009, %v96
    %v2026 = vmul.f32 %v2010, %v97
    %v2027 = vmul.f32 %v2011, %v98
    %v2028 = vmul.f32 %v2012, %v99
    %v2029 = vmul.f32 %v2013, %v100
    %v2030 = vmul.f32 %v2014, %v101
    %v2031 = vmul.f32 %v2015, %v102
    %v2032 = vmul.f32 %v2016, %v103
    %v2033 = vmul.f32 %v2017, %v104
    %v2034 = vmul.f32 %v2018, %v105
    %v2035 = vmul.f32 %v2019, %v106
    %v2036 = vmul.f32 %v2020, %v107
    %v2037 = vadd.f32 %v2021, %v108
    %v2038 = vadd.f32 %v2022, %v109
    %v2039 = vadd.f32 %v2023, %v110
    %v2040 = vadd.f32 %v2024, %v111
    %v2041 = vadd.f32 %v2025, %v112
    %v2042 = vadd.f32 %v2026, %v113
    %v2043 = vadd.f32 %v2027, %v114
    %v2044 = vadd.f32 %v2028, %v115
    %v2045 = vadd.f32 %v2029, %v116
    %v2046 = vadd.f32 %v2030, %v117
    %v2047 = vadd.f32 %v2031, %v118
    %v2048 = vadd.f32 %v2032, %v119
    %v2049 = vadd.f32 %v2033, %v120
    %v2050 = vadd.f32 %v2034, %v121
    %v2051 = vadd.f32 %v2035, %v122
    %v2052 = vadd.f32 %v2036, %v123
    %2057 = vrot.lane.b32.xlu0 %v1752, 2
    %v2058 = vpop.permute.xlu0 %2057
    %2059 = vrot.lane.b32.xlu0 %v1753, 2
    %v2060 = vpop.permute.xlu0 %2059
    %2061 = vrot.lane.b32.xlu0 %v1754, 2
    %v2062 = vpop.permute.xlu0 %2061
    %2063 = vrot.lane.b32.xlu0 %v1755, 2
    %v2064 = vpop.permute.xlu0 %2063
    %v2069 = vmul.f32 %v2041, %v2058
    %v2070 = vmul.f32 %v2042, %v2060
    %v2071 = vmul.f32 %v2043, %v2062
    %v2072 = vmul.f32 %v2044, %v2064
    %v2073 = vmul.f32 %v2037, %v2045
    %v2074 = vmul.f32 %v2038, %v2046
    %v2075 = vmul.f32 %v2039, %v2047
    %v2076 = vmul.f32 %v2040, %v2048
    %v2077 = vadd.f32 %v2069, %v2073
    %v2078 = vadd.f32 %v2070, %v2074
    %v2079 = vadd.f32 %v2071, %v2075
    %v2080 = vadd.f32 %v2072, %v2076
    %v2081 = vtanh.pop %v2077
    %v2082 = vtanh.pop %v2078
    %v2083 = vtanh.pop %v2079
    %v2084 = vtanh.pop %v2080
    %v2085 = vmul.f32 %v2049, %v2081
    %v2086 = vmul.f32 %v2050, %v2082
    %v2087 = vmul.f32 %v2051, %v2083
    %v2088 = vmul.f32 %v2052, %v2084
    %2093 = vrot.lane.b32.xlu0 %v2085, 120
    %v2094 = vpop.permute.xlu0 %2093
    %2095 = vrot.lane.b32.xlu0 %v2086, 120
    %v2096 = vpop.permute.xlu0 %2095
    %2097 = vrot.lane.b32.xlu0 %v2087, 120
    %v2098 = vpop.permute.xlu0 %2097
    %2099 = vrot.lane.b32.xlu0 %v2088, 120
    %v2100 = vpop.permute.xlu0 %2099
    %2105 = vmatprep.subr.mxu0 0.0
    %2106 = vmatpush1.msra.mxu0 %v2094
    %2107 = vmatprep.subr.mxu0 0.0
    %2108 = vmatpush1.msra.mxu0 %v2096
    %2109 = vmatprep.subr.mxu0 0.0
    %2110 = vmatpush1.msra.mxu0 %v2098
    %2111 = vmatprep.subr.mxu0 0.0
    %2112 = vmatpush1.msra.mxu0 %v2100
    %2113 = vmatprep.subr.mxu0 0.0
    %2114 = vmatpush1.msra.mxu0 0.0
    %2115 = vmatprep.subr.mxu0 0.0
    %2116 = vmatpush1.msra.mxu0 0.0
    %2117 = vmatprep.subr.mxu0 0.0
    %2118 = vmatpush1.msra.mxu0 0.0
    %2119 = vmatprep.subr.mxu0 0.0
    %2120 = vmatpush1.msra.mxu0 0.0
    %2121 = vmatprep.subr.mxu0 0.0
    %2122 = vmatpush1.msra.mxu0 0.0
    %2123 = vmatprep.subr.mxu0 0.0
    %2124 = vmatpush1.msra.mxu0 0.0
    %2125 = vmatprep.subr.mxu0 0.0
    %2126 = vmatpush1.msra.mxu0 0.0
    %2127 = vmatprep.subr.mxu0 0.0
    %2128 = vmatpush1.msra.mxu0 0.0
    %2129 = vmatprep.subr.mxu0 0.0
    %2130 = vmatpush1.msra.mxu0 0.0
    %2131 = vmatprep.subr.mxu0 0.0
    %2132 = vmatpush1.msra.mxu0 0.0
    %2133 = vmatprep.subr.mxu0 0.0
    %2134 = vmatpush1.msra.mxu0 0.0
    %2135 = vmatprep.subr.mxu0 0.0
    %2136 = vmatpush1.msra.mxu0 0.0
    %2137 = vmatprep.subr.mxu0 0.0
    %2138 = vmatpush1.msra.mxu0 0.0
    %2139 = vmatprep.subr.mxu0 0.0
    %2140 = vmatpush1.msra.mxu0 0.0
    %2141 = vmatprep.subr.mxu0 0.0
    %2142 = vmatpush1.msra.mxu0 0.0
    %2143 = vmatprep.subr.mxu0 0.0
    %2144 = vmatpush1.msra.mxu0 0.0
    %2145 = vmatprep.subr.mxu0 0.0
    %2146 = vmatpush1.msra.mxu0 0.0
    %2147 = vmatprep.subr.mxu0 0.0
    %2148 = vmatpush1.msra.mxu0 0.0
    %2149 = vmatprep.subr.mxu0 0.0
    %2150 = vmatpush1.msra.mxu0 0.0
    %2151 = vmatprep.subr.mxu0 0.0
    %2152 = vmatpush1.msra.mxu0 0.0
    %2153 = vmatprep.subr.mxu0 0.0
    %2154 = vmatpush1.msra.mxu0 0.0
    %2155 = vmatprep.subr.mxu0 0.0
    %2156 = vmatpush1.msra.mxu0 0.0
    %2157 = vmatprep.subr.mxu0 0.0
    %2158 = vmatpush1.msra.mxu0 0.0
    %2159 = vmatprep.subr.mxu0 0.0
    %2160 = vmatpush1.msra.mxu0 0.0
    %2161 = vmatprep.subr.mxu0 0.0
    %2162 = vmatpush1.msra.mxu0 0.0
    %2163 = vmatprep.subr.mxu0 0.0
    %2164 = vmatpush1.msra.mxu0 0.0
    %2165 = vmatprep.subr.mxu0 0.0
    %2166 = vmatpush1.msra.mxu0 0.0
    %2167 = vmatprep.subr.mxu0 0.0
    %2168 = vmatpush1.msra.mxu0 0.0
    %2169 = vmatprep.mubr.f32.mxu0 0.0
    %2170 = vmatmul.mubr.f32.gmra.mrb[0].mxu0 %v529
    %v2171 = vpop.f32.mrb[0].mxu0
    %v2172 = vadd.f32 0.0, %v2171
    %v2173 = vpop.f32.mrb[0].mxu0
    %2174 = vmatprep.mubr.f32.mxu0 0.0
    %2175 = vmatmul.mubr.f32.gmra.mrb[0].mxu0 %v532
    %v2176 = vpop.f32.mrb[0].mxu0
    %v2177 = vadd.f32 0.0, %v2176
    %v2178 = vpop.f32.mrb[0].mxu0
    %2179 = vmatprep.mubr.f32.mxu0 0.0
    %2180 = vmatmul.mubr.f32.gmra.mrb[0].mxu0 %v535
    %v2181 = vpop.f32.mrb[0].mxu0
    %v2182 = vadd.f32 0.0, %v2181
    %v2183 = vpop.f32.mrb[0].mxu0
    %2184 = vmatprep.mubr.f32.mxu0 0.0
    %2185 = vmatmul.mubr.f32.gmra.mrb[0].mxu0 %v538
    %v2186 = vpop.f32.mrb[0].mxu0
    %v2187 = vadd.f32 0.0, %v2186
    %v2188 = vpop.f32.mrb[0].mxu0
    %2189 = vmatprep.mubr.f32.mxu0 0.0
    %2190 = vmatmul.mubr.f32.gmra.mrb[0].mxu0 %v541
    %v2191 = vpop.f32.mrb[0].mxu0
    %v2192 = vadd.f32 0.0, %v2191
    %v2193 = vpop.f32.mrb[0].mxu0
    %2194 = vmatprep.mubr.f32.mxu0 0.0
    %2195 = vmatmul.mubr.f32.gmra.mrb[0].mxu0 %v544
    %v2196 = vpop.f32.mrb[0].mxu0
    %v2197 = vadd.f32 0.0, %v2196
    %v2198 = vpop.f32.mrb[0].mxu0
    %2199 = vmatprep.mubr.f32.mxu0 0.0
    %2200 = vmatmul.mubr.f32.gmra.mrb[0].mxu0 %v547
    %v2201 = vpop.f32.mrb[0].mxu0
    %v2202 = vadd.f32 0.0, %v2201
    %v2203 = vpop.f32.mrb[0].mxu0
    %2204 = vmatprep.mubr.f32.mxu0 0.0
    %2205 = vmatmul.mubr.f32.gmra.mrb[0].mxu0 %v550
    %v2206 = vpop.f32.mrb[0].mxu0
    %v2207 = vadd.f32 0.0, %v2206
    %v2208 = vpop.f32.mrb[0].mxu0
    %2209 = vmatprep.mubr.f32.mxu0 0.0
    %2210 = vmatmul.mubr.f32.gmra.mrb[0].mxu0 %v553
    %v2211 = vpop.f32.mrb[0].mxu0
    %v2212 = vadd.f32 0.0, %v2211
    %v2213 = vpop.f32.mrb[0].mxu0
    %2214 = vmatprep.mubr.f32.mxu0 0.0
    %2215 = vmatmul.mubr.f32.gmra.mrb[0].mxu0 %v556
    %v2216 = vpop.f32.mrb[0].mxu0
    %v2217 = vadd.f32 0.0, %v2216
    %v2218 = vpop.f32.mrb[0].mxu0
    %2219 = vmatprep.mubr.f32.mxu0 0.0
    %2220 = vmatmul.mubr.f32.gmra.mrb[0].mxu0 %v559
    %v2221 = vpop.f32.mrb[0].mxu0
    %v2222 = vadd.f32 0.0, %v2221
    %v2223 = vpop.f32.mrb[0].mxu0
    %2224 = vmatprep.mubr.f32.mxu0 0.0
    %2225 = vmatmul.mubr.f32.gmra.mrb[0].mxu0 %v562
    %v2226 = vpop.f32.mrb[0].mxu0
    %v2227 = vadd.f32 0.0, %v2226
    %v2228 = vpop.f32.mrb[0].mxu0
    %2229 = vmatprep.mubr.f32.mxu0 0.0
    %2230 = vmatmul.mubr.f32.gmra.mrb[0].mxu0 %v565
    %v2231 = vpop.f32.mrb[0].mxu0
    %v2232 = vadd.f32 0.0, %v2231
    %v2233 = vpop.f32.mrb[0].mxu0
    %2234 = vmatprep.mubr.f32.mxu0 0.0
    %2235 = vmatmul.mubr.f32.gmra.mrb[0].mxu0 %v568
    %v2236 = vpop.f32.mrb[0].mxu0
    %v2237 = vadd.f32 0.0, %v2236
    %v2238 = vpop.f32.mrb[0].mxu0
    %2239 = vmatprep.mubr.f32.mxu0 0.0
    %2240 = vmatmul.mubr.f32.gmra.mrb[0].mxu0 %v571
    %v2241 = vpop.f32.mrb[0].mxu0
    %v2242 = vadd.f32 0.0, %v2241
    %v2243 = vpop.f32.mrb[0].mxu0
    %2244 = vmatprep.mubr.f32.mxu0 0.0
    %2245 = vmatmul.mubr.f32.gmra.mrb[0].mxu0 %v574
    %v2246 = vpop.f32.mrb[0].mxu0
    %v2247 = vadd.f32 0.0, %v2246
    %v2248 = vpop.f32.mrb[0].mxu0
    %2249 = vdwg.mxu0
    %2266 = vrot.lane.b32.xlu0 %v2172, 10
    %v2267 = vpop.permute.xlu0 %2266
    %2268 = vrot.lane.b32.xlu0 %v2177, 10
    %v2269 = vpop.permute.xlu0 %2268
    %2270 = vrot.lane.b32.xlu0 %v2182, 10
    %v2271 = vpop.permute.xlu0 %2270
    %2272 = vrot.lane.b32.xlu0 %v2187, 10
    %v2273 = vpop.permute.xlu0 %2272
    %2274 = vrot.lane.b32.xlu0 %v2192, 10
    %v2275 = vpop.permute.xlu0 %2274
    %2276 = vrot.lane.b32.xlu0 %v2197, 10
    %v2277 = vpop.permute.xlu0 %2276
    %2278 = vrot.lane.b32.xlu0 %v2202, 10
    %v2279 = vpop.permute.xlu0 %2278
    %2280 = vrot.lane.b32.xlu0 %v2207, 10
    %v2281 = vpop.permute.xlu0 %2280
    %2282 = vrot.lane.b32.xlu0 %v2212, 10
    %v2283 = vpop.permute.xlu0 %2282
    %2284 = vrot.lane.b32.xlu0 %v2217, 10
    %v2285 = vpop.permute.xlu0 %2284
    %2286 = vrot.lane.b32.xlu0 %v2222, 10
    %v2287 = vpop.permute.xlu0 %2286
    %2288 = vrot.lane.b32.xlu0 %v2227, 10
    %v2289 = vpop.permute.xlu0 %2288
    %2290 = vrot.lane.b32.xlu0 %v2232, 10
    %v2291 = vpop.permute.xlu0 %2290
    %2292 = vrot.lane.b32.xlu0 %v2237, 10
    %v2293 = vpop.permute.xlu0 %2292
    %2294 = vrot.lane.b32.xlu0 %v2242, 10
    %v2295 = vpop.permute.xlu0 %2294
    %2296 = vrot.lane.b32.xlu0 %v2247, 10
    %v2297 = vpop.permute.xlu0 %2296
    %v2314 = vadd.f32 %v449, %v2267
    %v2315 = vadd.f32 %v454, %v2269
    %v2316 = vadd.f32 %v459, %v2271
    %v2317 = vadd.f32 %v464, %v2273
    %v2318 = vadd.f32 %v469, %v2275
    %v2319 = vadd.f32 %v474, %v2277
    %v2320 = vadd.f32 %v479, %v2279
    %v2321 = vadd.f32 %v484, %v2281
    %v2322 = vadd.f32 %v489, %v2283
    %v2323 = vadd.f32 %v494, %v2285
    %v2324 = vadd.f32 %v499, %v2287
    %v2325 = vadd.f32 %v504, %v2289
    %v2326 = vadd.f32 %v509, %v2291
    %v2327 = vadd.f32 %v514, %v2293
    %v2328 = vadd.f32 %v519, %v2295
    %v2329 = vadd.f32 %v524, %v2297
    %v2330 = vtanh.pop %v2314
    %v2331 = vtanh.pop %v2315
    %v2332 = vtanh.pop %v2316
    %v2333 = vtanh.pop %v2317
    %v2334 = vtanh.pop %v2318
    %v2335 = vtanh.pop %v2319
    %v2336 = vtanh.pop %v2320
    %v2337 = vtanh.pop %v2321
    %v2338 = vtanh.pop %v2322
    %v2339 = vtanh.pop %v2323
    %v2340 = vtanh.pop %v2324
    %v2341 = vtanh.pop %v2325
    %v2342 = vtanh.pop %v2326
    %v2343 = vtanh.pop %v2327
    %v2344 = vtanh.pop %v2328
    %v2345 = vtanh.pop %v2329
    %v2346 = vmul.f32 %v2330, %v92
    %v2347 = vmul.f32 %v2331, %v93
    %v2348 = vmul.f32 %v2332, %v94
    %v2349 = vmul.f32 %v2333, %v95
    %v2350 = vmul.f32 %v2334, %v96
    %v2351 = vmul.f32 %v2335, %v97
    %v2352 = vmul.f32 %v2336, %v98
    %v2353 = vmul.f32 %v2337, %v99
    %v2354 = vmul.f32 %v2338, %v100
    %v2355 = vmul.f32 %v2339, %v101
    %v2356 = vmul.f32 %v2340, %v102
    %v2357 = vmul.f32 %v2341, %v103
    %v2358 = vmul.f32 %v2342, %v104
    %v2359 = vmul.f32 %v2343, %v105
    %v2360 = vmul.f32 %v2344, %v106
    %v2361 = vmul.f32 %v2345, %v107
    %v2362 = vadd.f32 %v2346, %v108
    %v2363 = vadd.f32 %v2347, %v109
    %v2364 = vadd.f32 %v2348, %v110
    %v2365 = vadd.f32 %v2349, %v111
    %v2366 = vadd.f32 %v2350, %v112
    %v2367 = vadd.f32 %v2351, %v113
    %v2368 = vadd.f32 %v2352, %v114
    %v2369 = vadd.f32 %v2353, %v115
    %v2370 = vadd.f32 %v2354, %v116
    %v2371 = vadd.f32 %v2355, %v117
    %v2372 = vadd.f32 %v2356, %v118
    %v2373 = vadd.f32 %v2357, %v119
    %v2374 = vadd.f32 %v2358, %v120
    %v2375 = vadd.f32 %v2359, %v121
    %v2376 = vadd.f32 %v2360, %v122
    %v2377 = vadd.f32 %v2361, %v123
    %2382 = vrot.lane.b32.xlu0 %v2077, 2
    %v2383 = vpop.permute.xlu0 %2382
    %2384 = vrot.lane.b32.xlu0 %v2078, 2
    %v2385 = vpop.permute.xlu0 %2384
    %2386 = vrot.lane.b32.xlu0 %v2079, 2
    %v2387 = vpop.permute.xlu0 %2386
    %2388 = vrot.lane.b32.xlu0 %v2080, 2
    %v2389 = vpop.permute.xlu0 %2388
    %v2394 = vmul.f32 %v2366, %v2383
    %v2395 = vmul.f32 %v2367, %v2385
    %v2396 = vmul.f32 %v2368, %v2387
    %v2397 = vmul.f32 %v2369, %v2389
    %v2398 = vmul.f32 %v2362, %v2370
    %v2399 = vmul.f32 %v2363, %v2371
    %v2400 = vmul.f32 %v2364, %v2372
    %v2401 = vmul.f32 %v2365, %v2373
    %v2402 = vadd.f32 %v2394, %v2398
    %v2403 = vadd.f32 %v2395, %v2399
    %v2404 = vadd.f32 %v2396, %v2400
    %v2405 = vadd.f32 %v2397, %v2401
    %v2406 = vtanh.pop %v2402
    %v2407 = vtanh.pop %v2403
    %v2408 = vtanh.pop %v2404
    %v2409 = vtanh.pop %v2405
    %v2410 = vmul.f32 %v2374, %v2406
    %v2411 = vmul.f32 %v2375, %v2407
    %v2412 = vmul.f32 %v2376, %v2408
    %v2413 = vmul.f32 %v2377, %v2409
    %2418 = vrot.lane.b32.xlu0 %v2410, 118
    %v2419 = vpop.permute.xlu0 %2418
    %2420 = vrot.lane.b32.xlu0 %v2411, 118
    %v2421 = vpop.permute.xlu0 %2420
    %2422 = vrot.lane.b32.xlu0 %v2412, 118
    %v2423 = vpop.permute.xlu0 %2422
    %2424 = vrot.lane.b32.xlu0 %v2413, 118
    %v2425 = vpop.permute.xlu0 %2424
    %2430 = vmatprep.subr.mxu0 0.0
    %2431 = vmatpush1.msra.mxu0 %v2419
    %2432 = vmatprep.subr.mxu0 0.0
    %2433 = vmatpush1.msra.mxu0 %v2421
    %2434 = vmatprep.subr.mxu0 0.0
    %2435 = vmatpush1.msra.mxu0 %v2423
    %2436 = vmatprep.subr.mxu0 0.0
    %2437 = vmatpush1.msra.mxu0 %v2425
    %2438 = vmatprep.subr.mxu0 0.0
    %2439 = vmatpush1.msra.mxu0 0.0
    %2440 = vmatprep.subr.mxu0 0.0
    %2441 = vmatpush1.msra.mxu0 0.0
    %2442 = vmatprep.subr.mxu0 0.0
    %2443 = vmatpush1.msra.mxu0 0.0
    %2444 = vmatprep.subr.mxu0 0.0
    %2445 = vmatpush1.msra.mxu0 0.0
    %2446 = vmatprep.subr.mxu0 0.0
    %2447 = vmatpush1.msra.mxu0 0.0
    %2448 = vmatprep.subr.mxu0 0.0
    %2449 = vmatpush1.msra.mxu0 0.0
    %2450 = vmatprep.subr.mxu0 0.0
    %2451 = vmatpush1.msra.mxu0 0.0
    %2452 = vmatprep.subr.mxu0 0.0
    %2453 = vmatpush1.msra.mxu0 0.0
    %2454 = vmatprep.subr.mxu0 0.0
    %2455 = vmatpush1.msra.mxu0 0.0
    %2456 = vmatprep.subr.mxu0 0.0
    %2457 = vmatpush1.msra.mxu0 0.0
    %2458 = vmatprep.subr.mxu0 0.0
    %2459 = vmatpush1.msra.mxu0 0.0
    %2460 = vmatprep.subr.mxu0 0.0
    %2461 = vmatpush1.msra.mxu0 0.0
    %2462 = vmatprep.subr.mxu0 0.0
    %2463 = vmatpush1.msra.mxu0 0.0
    %2464 = vmatprep.subr.mxu0 0.0
    %2465 = vmatpush1.msra.mxu0 0.0
    %2466 = vmatprep.subr.mxu0 0.0
    %2467 = vmatpush1.msra.mxu0 0.0
    %2468 = vmatprep.subr.mxu0 0.0
    %2469 = vmatpush1.msra.mxu0 0.0
    %2470 = vmatprep.subr.mxu0 0.0
    %2471 = vmatpush1.msra.mxu0 0.0
    %2472 = vmatprep.subr.mxu0 0.0
    %2473 = vmatpush1.msra.mxu0 0.0
    %2474 = vmatprep.subr.mxu0 0.0
    %2475 = vmatpush1.msra.mxu0 0.0
    %2476 = vmatprep.subr.mxu0 0.0
    %2477 = vmatpush1.msra.mxu0 0.0
    %2478 = vmatprep.subr.mxu0 0.0
    %2479 = vmatpush1.msra.mxu0 0.0
    %2480 = vmatprep.subr.mxu0 0.0
    %2481 = vmatpush1.msra.mxu0 0.0
    %2482 = vmatprep.subr.mxu0 0.0
    %2483 = vmatpush1.msra.mxu0 0.0
    %2484 = vmatprep.subr.mxu0 0.0
    %2485 = vmatpush1.msra.mxu0 0.0
    %2486 = vmatprep.subr.mxu0 0.0
    %2487 = vmatpush1.msra.mxu0 0.0
    %2488 = vmatprep.subr.mxu0 0.0
    %2489 = vmatpush1.msra.mxu0 0.0
    %2490 = vmatprep.subr.mxu0 0.0
    %2491 = vmatpush1.msra.mxu0 0.0
    %2492 = vmatprep.subr.mxu0 0.0
    %2493 = vmatpush1.msra.mxu0 0.0
    %2494 = vmatprep.mubr.f32.mxu0 0.0
    %2495 = vmatmul.mubr.f32.gmra.mrb[0].mxu0 %v529
    %v2496 = vpop.f32.mrb[0].mxu0
    %v2497 = vadd.f32 0.0, %v2496
    %v2498 = vpop.f32.mrb[0].mxu0
    %2499 = vmatprep.mubr.f32.mxu0 0.0
    %2500 = vmatmul.mubr.f32.gmra.mrb[0].mxu0 %v532
    %v2501 = vpop.f32.mrb[0].mxu0
    %v2502 = vadd.f32 0.0, %v2501
    %v2503 = vpop.f32.mrb[0].mxu0
    %2504 = vmatprep.mubr.f32.mxu0 0.0
    %2505 = vmatmul.mubr.f32.gmra.mrb[0].mxu0 %v535
    %v2506 = vpop.f32.mrb[0].mxu0
    %v2507 = vadd.f32 0.0, %v2506
    %v2508 = vpop.f32.mrb[0].mxu0
    %2509 = vmatprep.mubr.f32.mxu0 0.0
    %2510 = vmatmul.mubr.f32.gmra.mrb[0].mxu0 %v538
    %v2511 = vpop.f32.mrb[0].mxu0
    %v2512 = vadd.f32 0.0, %v2511
    %v2513 = vpop.f32.mrb[0].mxu0
    %2514 = vmatprep.mubr.f32.mxu0 0.0
    %2515 = vmatmul.mubr.f32.gmra.mrb[0].mxu0 %v541
    %v2516 = vpop.f32.mrb[0].mxu0
    %v2517 = vadd.f32 0.0, %v2516
    %v2518 = vpop.f32.mrb[0].mxu0
    %2519 = vmatprep.mubr.f32.mxu0 0.0
    %2520 = vmatmul.mubr.f32.gmra.mrb[0].mxu0 %v544
    %v2521 = vpop.f32.mrb[0].mxu0
    %v2522 = vadd.f32 0.0, %v2521
    %v2523 = vpop.f32.mrb[0].mxu0
    %2524 = vmatprep.mubr.f32.mxu0 0.0
    %2525 = vmatmul.mubr.f32.gmra.mrb[0].mxu0 %v547
    %v2526 = vpop.f32.mrb[0].mxu0
    %v2527 = vadd.f32 0.0, %v2526
    %v2528 = vpop.f32.mrb[0].mxu0
    %2529 = vmatprep.mubr.f32.mxu0 0.0
    %2530 = vmatmul.mubr.f32.gmra.mrb[0].mxu0 %v550
    %v2531 = vpop.f32.mrb[0].mxu0
    %v2532 = vadd.f32 0.0, %v2531
    %v2533 = vpop.f32.mrb[0].mxu0
    %2534 = vmatprep.mubr.f32.mxu0 0.0
    %2535 = vmatmul.mubr.f32.gmra.mrb[0].mxu0 %v553
    %v2536 = vpop.f32.mrb[0].mxu0
    %v2537 = vadd.f32 0.0, %v2536
    %v2538 = vpop.f32.mrb[0].mxu0
    %2539 = vmatprep.mubr.f32.mxu0 0.0
    %2540 = vmatmul.mubr.f32.gmra.mrb[0].mxu0 %v556
    %v2541 = vpop.f32.mrb[0].mxu0
    %v2542 = vadd.f32 0.0, %v2541
    %v2543 = vpop.f32.mrb[0].mxu0
    %2544 = vmatprep.mubr.f32.mxu0 0.0
    %2545 = vmatmul.mubr.f32.gmra.mrb[0].mxu0 %v559
    %v2546 = vpop.f32.mrb[0].mxu0
    %v2547 = vadd.f32 0.0, %v2546
    %v2548 = vpop.f32.mrb[0].mxu0
    %2549 = vmatprep.mubr.f32.mxu0 0.0
    %2550 = vmatmul.mubr.f32.gmra.mrb[0].mxu0 %v562
    %v2551 = vpop.f32.mrb[0].mxu0
    %v2552 = vadd.f32 0.0, %v2551
    %v2553 = vpop.f32.mrb[0].mxu0
    %2554 = vmatprep.mubr.f32.mxu0 0.0
    %2555 = vmatmul.mubr.f32.gmra.mrb[0].mxu0 %v565
    %v2556 = vpop.f32.mrb[0].mxu0
    %v2557 = vadd.f32 0.0, %v2556
    %v2558 = vpop.f32.mrb[0].mxu0
    %2559 = vmatprep.mubr.f32.mxu0 0.0
    %2560 = vmatmul.mubr.f32.gmra.mrb[0].mxu0 %v568
    %v2561 = vpop.f32.mrb[0].mxu0
    %v2562 = vadd.f32 0.0, %v2561
    %v2563 = vpop.f32.mrb[0].mxu0
    %2564 = vmatprep.mubr.f32.mxu0 0.0
    %2565 = vmatmul.mubr.f32.gmra.mrb[0].mxu0 %v571
    %v2566 = vpop.f32.mrb[0].mxu0
    %v2567 = vadd.f32 0.0, %v2566
    %v2568 = vpop.f32.mrb[0].mxu0
    %2569 = vmatprep.mubr.f32.mxu0 0.0
    %2570 = vmatmul.mubr.f32.gmra.mrb[0].mxu0 %v574
    %v2571 = vpop.f32.mrb[0].mxu0
    %v2572 = vadd.f32 0.0, %v2571
    %v2573 = vpop.f32.mrb[0].mxu0
    %2574 = vdwg.mxu0
    %2591 = vrot.lane.b32.xlu0 %v2497, 12
    %v2592 = vpop.permute.xlu0 %2591
    %2593 = vrot.lane.b32.xlu0 %v2502, 12
    %v2594 = vpop.permute.xlu0 %2593
    %2595 = vrot.lane.b32.xlu0 %v2507, 12
    %v2596 = vpop.permute.xlu0 %2595
    %2597 = vrot.lane.b32.xlu0 %v2512, 12
    %v2598 = vpop.permute.xlu0 %2597
    %2599 = vrot.lane.b32.xlu0 %v2517, 12
    %v2600 = vpop.permute.xlu0 %2599
    %2601 = vrot.lane.b32.xlu0 %v2522, 12
    %v2602 = vpop.permute.xlu0 %2601
    %2603 = vrot.lane.b32.xlu0 %v2527, 12
    %v2604 = vpop.permute.xlu0 %2603
    %2605 = vrot.lane.b32.xlu0 %v2532, 12
    %v2606 = vpop.permute.xlu0 %2605
    %2607 = vrot.lane.b32.xlu0 %v2537, 12
    %v2608 = vpop.permute.xlu0 %2607
    %2609 = vrot.lane.b32.xlu0 %v2542, 12
    %v2610 = vpop.permute.xlu0 %2609
    %2611 = vrot.lane.b32.xlu0 %v2547, 12
    %v2612 = vpop.permute.xlu0 %2611
    %2613 = vrot.lane.b32.xlu0 %v2552, 12
    %v2614 = vpop.permute.xlu0 %2613
    %2615 = vrot.lane.b32.xlu0 %v2557, 12
    %v2616 = vpop.permute.xlu0 %2615
    %2617 = vrot.lane.b32.xlu0 %v2562, 12
    %v2618 = vpop.permute.xlu0 %2617
    %2619 = vrot.lane.b32.xlu0 %v2567, 12
    %v2620 = vpop.permute.xlu0 %2619
    %2621 = vrot.lane.b32.xlu0 %v2572, 12
    %v2622 = vpop.permute.xlu0 %2621
    %v2639 = vadd.f32 %v449, %v2592
    %v2640 = vadd.f32 %v454, %v2594
    %v2641 = vadd.f32 %v459, %v2596
    %v2642 = vadd.f32 %v464, %v2598
    %v2643 = vadd.f32 %v469, %v2600
    %v2644 = vadd.f32 %v474, %v2602
    %v2645 = vadd.f32 %v479, %v2604
    %v2646 = vadd.f32 %v484, %v2606
    %v2647 = vadd.f32 %v489, %v2608
    %v2648 = vadd.f32 %v494, %v2610
    %v2649 = vadd.f32 %v499, %v2612
    %v2650 = vadd.f32 %v504, %v2614
    %v2651 = vadd.f32 %v509, %v2616
    %v2652 = vadd.f32 %v514, %v2618
    %v2653 = vadd.f32 %v519, %v2620
    %v2654 = vadd.f32 %v524, %v2622
    %v2655 = vtanh.pop %v2639
    %v2656 = vtanh.pop %v2640
    %v2657 = vtanh.pop %v2641
    %v2658 = vtanh.pop %v2642
    %v2659 = vtanh.pop %v2643
    %v2660 = vtanh.pop %v2644
    %v2661 = vtanh.pop %v2645
    %v2662 = vtanh.pop %v2646
    %v2663 = vtanh.pop %v2647
    %v2664 = vtanh.pop %v2648
    %v2665 = vtanh.pop %v2649
    %v2666 = vtanh.pop %v2650
    %v2667 = vtanh.pop %v2651
    %v2668 = vtanh.pop %v2652
    %v2669 = vtanh.pop %v2653
    %v2670 = vtanh.pop %v2654
    %v2671 = vmul.f32 %v2655, %v92
    %v2672 = vmul.f32 %v2656, %v93
    %v2673 = vmul.f32 %v2657, %v94
    %v2674 = vmul.f32 %v2658, %v95
    %v2675 = vmul.f32 %v2659, %v96
    %v2676 = vmul.f32 %v2660, %v97
    %v2677 = vmul.f32 %v2661, %v98
    %v2678 = vmul.f32 %v2662, %v99
    %v2679 = vmul.f32 %v2663, %v100
    %v2680 = vmul.f32 %v2664, %v101
    %v2681 = vmul.f32 %v2665, %v102
    %v2682 = vmul.f32 %v2666, %v103
    %v2683 = vmul.f32 %v2667, %v104
    %v2684 = vmul.f32 %v2668, %v105
    %v2685 = vmul.f32 %v2669, %v106
    %v2686 = vmul.f32 %v2670, %v107
    %v2687 = vadd.f32 %v2671, %v108
    %v2688 = vadd.f32 %v2672, %v109
    %v2689 = vadd.f32 %v2673, %v110
    %v2690 = vadd.f32 %v2674, %v111
    %v2691 = vadd.f32 %v2675, %v112
    %v2692 = vadd.f32 %v2676, %v113
    %v2693 = vadd.f32 %v2677, %v114
    %v2694 = vadd.f32 %v2678, %v115
    %v2695 = vadd.f32 %v2679, %v116
    %v2696 = vadd.f32 %v2680, %v117
    %v2697 = vadd.f32 %v2681, %v118
    %v2698 = vadd.f32 %v2682, %v119
    %v2699 = vadd.f32 %v2683, %v120
    %v2700 = vadd.f32 %v2684, %v121
    %v2701 = vadd.f32 %v2685, %v122
    %v2702 = vadd.f32 %v2686, %v123
    %2707 = vrot.lane.b32.xlu0 %v2402, 2
    %v2708 = vpop.permute.xlu0 %2707
    %2709 = vrot.lane.b32.xlu0 %v2403, 2
    %v2710 = vpop.permute.xlu0 %2709
    %2711 = vrot.lane.b32.xlu0 %v2404, 2
    %v2712 = vpop.permute.xlu0 %2711
    %2713 = vrot.lane.b32.xlu0 %v2405, 2
    %v2714 = vpop.permute.xlu0 %2713
    %v2719 = vmul.f32 %v2691, %v2708
    %v2720 = vmul.f32 %v2692, %v2710
    %v2721 = vmul.f32 %v2693, %v2712
    %v2722 = vmul.f32 %v2694, %v2714
    %v2723 = vmul.f32 %v2687, %v2695
    %v2724 = vmul.f32 %v2688, %v2696
    %v2725 = vmul.f32 %v2689, %v2697
    %v2726 = vmul.f32 %v2690, %v2698
    %v2727 = vadd.f32 %v2719, %v2723
    %v2728 = vadd.f32 %v2720, %v2724
    %v2729 = vadd.f32 %v2721, %v2725
    %v2730 = vadd.f32 %v2722, %v2726
    %v2731 = vtanh.pop %v2727
    %v2732 = vtanh.pop %v2728
    %v2733 = vtanh.pop %v2729
    %v2734 = vtanh.pop %v2730
    %v2735 = vmul.f32 %v2699, %v2731
    %v2736 = vmul.f32 %v2700, %v2732
    %v2737 = vmul.f32 %v2701, %v2733
    %v2738 = vmul.f32 %v2702, %v2734
    %2743 = vrot.lane.b32.xlu0 %v2735, 116
    %v2744 = vpop.permute.xlu0 %2743
    %2745 = vrot.lane.b32.xlu0 %v2736, 116
    %v2746 = vpop.permute.xlu0 %2745
    %2747 = vrot.lane.b32.xlu0 %v2737, 116
    %v2748 = vpop.permute.xlu0 %2747
    %2749 = vrot.lane.b32.xlu0 %v2738, 116
    %v2750 = vpop.permute.xlu0 %2749
    %2755 = vmatprep.subr.mxu0 0.0
    %2756 = vmatpush1.msra.mxu0 %v2744
    %2757 = vmatprep.subr.mxu0 0.0
    %2758 = vmatpush1.msra.mxu0 %v2746
    %2759 = vmatprep.subr.mxu0 0.0
    %2760 = vmatpush1.msra.mxu0 %v2748
    %2761 = vmatprep.subr.mxu0 0.0
    %2762 = vmatpush1.msra.mxu0 %v2750
    %2763 = vmatprep.subr.mxu0 0.0
    %2764 = vmatpush1.msra.mxu0 0.0
    %2765 = vmatprep.subr.mxu0 0.0
    %2766 = vmatpush1.msra.mxu0 0.0
    %2767 = vmatprep.subr.mxu0 0.0
    %2768 = vmatpush1.msra.mxu0 0.0
    %2769 = vmatprep.subr.mxu0 0.0
    %2770 = vmatpush1.msra.mxu0 0.0
    %2771 = vmatprep.subr.mxu0 0.0
    %2772 = vmatpush1.msra.mxu0 0.0
    %2773 = vmatprep.subr.mxu0 0.0
    %2774 = vmatpush1.msra.mxu0 0.0
    %2775 = vmatprep.subr.mxu0 0.0
    %2776 = vmatpush1.msra.mxu0 0.0
    %2777 = vmatprep.subr.mxu0 0.0
    %2778 = vmatpush1.msra.mxu0 0.0
    %2779 = vmatprep.subr.mxu0 0.0
    %2780 = vmatpush1.msra.mxu0 0.0
    %2781 = vmatprep.subr.mxu0 0.0
    %2782 = vmatpush1.msra.mxu0 0.0
    %2783 = vmatprep.subr.mxu0 0.0
    %2784 = vmatpush1.msra.mxu0 0.0
    %2785 = vmatprep.subr.mxu0 0.0
    %2786 = vmatpush1.msra.mxu0 0.0
    %2787 = vmatprep.subr.mxu0 0.0
    %2788 = vmatpush1.msra.mxu0 0.0
    %2789 = vmatprep.subr.mxu0 0.0
    %2790 = vmatpush1.msra.mxu0 0.0
    %2791 = vmatprep.subr.mxu0 0.0
    %2792 = vmatpush1.msra.mxu0 0.0
    %2793 = vmatprep.subr.mxu0 0.0
    %2794 = vmatpush1.msra.mxu0 0.0
    %2795 = vmatprep.subr.mxu0 0.0
    %2796 = vmatpush1.msra.mxu0 0.0
    %2797 = vmatprep.subr.mxu0 0.0
    %2798 = vmatpush1.msra.mxu0 0.0
    %2799 = vmatprep.subr.mxu0 0.0
    %2800 = vmatpush1.msra.mxu0 0.0
    %2801 = vmatprep.subr.mxu0 0.0
    %2802 = vmatpush1.msra.mxu0 0.0
    %2803 = vmatprep.subr.mxu0 0.0
    %2804 = vmatpush1.msra.mxu0 0.0
    %2805 = vmatprep.subr.mxu0 0.0
    %2806 = vmatpush1.msra.mxu0 0.0
    %2807 = vmatprep.subr.mxu0 0.0
    %2808 = vmatpush1.msra.mxu0 0.0
    %2809 = vmatprep.subr.mxu0 0.0
    %2810 = vmatpush1.msra.mxu0 0.0
    %2811 = vmatprep.subr.mxu0 0.0
    %2812 = vmatpush1.msra.mxu0 0.0
    %2813 = vmatprep.subr.mxu0 0.0
    %2814 = vmatpush1.msra.mxu0 0.0
    %2815 = vmatprep.subr.mxu0 0.0
    %2816 = vmatpush1.msra.mxu0 0.0
    %2817 = vmatprep.subr.mxu0 0.0
    %2818 = vmatpush1.msra.mxu0 0.0
    %2819 = vmatprep.mubr.f32.mxu0 0.0
    %2820 = vmatmul.mubr.f32.gmra.mrb[0].mxu0 %v529
    %v2821 = vpop.f32.mrb[0].mxu0
    %v2822 = vadd.f32 0.0, %v2821
    %v2823 = vpop.f32.mrb[0].mxu0
    %2824 = vmatprep.mubr.f32.mxu0 0.0
    %2825 = vmatmul.mubr.f32.gmra.mrb[0].mxu0 %v532
    %v2826 = vpop.f32.mrb[0].mxu0
    %v2827 = vadd.f32 0.0, %v2826
    %v2828 = vpop.f32.mrb[0].mxu0
    %2829 = vmatprep.mubr.f32.mxu0 0.0
    %2830 = vmatmul.mubr.f32.gmra.mrb[0].mxu0 %v535
    %v2831 = vpop.f32.mrb[0].mxu0
    %v2832 = vadd.f32 0.0, %v2831
    %v2833 = vpop.f32.mrb[0].mxu0
    %2834 = vmatprep.mubr.f32.mxu0 0.0
    %2835 = vmatmul.mubr.f32.gmra.mrb[0].mxu0 %v538
    %v2836 = vpop.f32.mrb[0].mxu0
    %v2837 = vadd.f32 0.0, %v2836
    %v2838 = vpop.f32.mrb[0].mxu0
    %2839 = vmatprep.mubr.f32.mxu0 0.0
    %2840 = vmatmul.mubr.f32.gmra.mrb[0].mxu0 %v541
    %v2841 = vpop.f32.mrb[0].mxu0
    %v2842 = vadd.f32 0.0, %v2841
    %v2843 = vpop.f32.mrb[0].mxu0
    %2844 = vmatprep.mubr.f32.mxu0 0.0
    %2845 = vmatmul.mubr.f32.gmra.mrb[0].mxu0 %v544
    %v2846 = vpop.f32.mrb[0].mxu0
    %v2847 = vadd.f32 0.0, %v2846
    %v2848 = vpop.f32.mrb[0].mxu0
    %2849 = vmatprep.mubr.f32.mxu0 0.0
    %2850 = vmatmul.mubr.f32.gmra.mrb[0].mxu0 %v547
    %v2851 = vpop.f32.mrb[0].mxu0
    %v2852 = vadd.f32 0.0, %v2851
    %v2853 = vpop.f32.mrb[0].mxu0
    %2854 = vmatprep.mubr.f32.mxu0 0.0
    %2855 = vmatmul.mubr.f32.gmra.mrb[0].mxu0 %v550
    %v2856 = vpop.f32.mrb[0].mxu0
    %v2857 = vadd.f32 0.0, %v2856
    %v2858 = vpop.f32.mrb[0].mxu0
    %2859 = vmatprep.mubr.f32.mxu0 0.0
    %2860 = vmatmul.mubr.f32.gmra.mrb[0].mxu0 %v553
    %v2861 = vpop.f32.mrb[0].mxu0
    %v2862 = vadd.f32 0.0, %v2861
    %v2863 = vpop.f32.mrb[0].mxu0
    %2864 = vmatprep.mubr.f32.mxu0 0.0
    %2865 = vmatmul.mubr.f32.gmra.mrb[0].mxu0 %v556
    %v2866 = vpop.f32.mrb[0].mxu0
    %v2867 = vadd.f32 0.0, %v2866
    %v2868 = vpop.f32.mrb[0].mxu0
    %2869 = vmatprep.mubr.f32.mxu0 0.0
    %2870 = vmatmul.mubr.f32.gmra.mrb[0].mxu0 %v559
    %v2871 = vpop.f32.mrb[0].mxu0
    %v2872 = vadd.f32 0.0, %v2871
    %v2873 = vpop.f32.mrb[0].mxu0
    %2874 = vmatprep.mubr.f32.mxu0 0.0
    %2875 = vmatmul.mubr.f32.gmra.mrb[0].mxu0 %v562
    %v2876 = vpop.f32.mrb[0].mxu0
    %v2877 = vadd.f32 0.0, %v2876
    %v2878 = vpop.f32.mrb[0].mxu0
    %2879 = vmatprep.mubr.f32.mxu0 0.0
    %2880 = vmatmul.mubr.f32.gmra.mrb[0].mxu0 %v565
    %v2881 = vpop.f32.mrb[0].mxu0
    %v2882 = vadd.f32 0.0, %v2881
    %v2883 = vpop.f32.mrb[0].mxu0
    %2884 = vmatprep.mubr.f32.mxu0 0.0
    %2885 = vmatmul.mubr.f32.gmra.mrb[0].mxu0 %v568
    %v2886 = vpop.f32.mrb[0].mxu0
    %v2887 = vadd.f32 0.0, %v2886
    %v2888 = vpop.f32.mrb[0].mxu0
    %2889 = vmatprep.mubr.f32.mxu0 0.0
    %2890 = vmatmul.mubr.f32.gmra.mrb[0].mxu0 %v571
    %v2891 = vpop.f32.mrb[0].mxu0
    %v2892 = vadd.f32 0.0, %v2891
    %v2893 = vpop.f32.mrb[0].mxu0
    %2894 = vmatprep.mubr.f32.mxu0 0.0
    %2895 = vmatmul.mubr.f32.gmra.mrb[0].mxu0 %v574
    %v2896 = vpop.f32.mrb[0].mxu0
    %v2897 = vadd.f32 0.0, %v2896
    %v2898 = vpop.f32.mrb[0].mxu0
    %2899 = vdwg.mxu0
    %2916 = vrot.lane.b32.xlu0 %v2822, 14
    %v2917 = vpop.permute.xlu0 %2916
    %2918 = vrot.lane.b32.xlu0 %v2827, 14
    %v2919 = vpop.permute.xlu0 %2918
    %2920 = vrot.lane.b32.xlu0 %v2832, 14
    %v2921 = vpop.permute.xlu0 %2920
    %2922 = vrot.lane.b32.xlu0 %v2837, 14
    %v2923 = vpop.permute.xlu0 %2922
    %2924 = vrot.lane.b32.xlu0 %v2842, 14
    %v2925 = vpop.permute.xlu0 %2924
    %2926 = vrot.lane.b32.xlu0 %v2847, 14
    %v2927 = vpop.permute.xlu0 %2926
    %2928 = vrot.lane.b32.xlu0 %v2852, 14
    %v2929 = vpop.permute.xlu0 %2928
    %2930 = vrot.lane.b32.xlu0 %v2857, 14
    %v2931 = vpop.permute.xlu0 %2930
    %2932 = vrot.lane.b32.xlu0 %v2862, 14
    %v2933 = vpop.permute.xlu0 %2932
    %2934 = vrot.lane.b32.xlu0 %v2867, 14
    %v2935 = vpop.permute.xlu0 %2934
    %2936 = vrot.lane.b32.xlu0 %v2872, 14
    %v2937 = vpop.permute.xlu0 %2936
    %2938 = vrot.lane.b32.xlu0 %v2877, 14
    %v2939 = vpop.permute.xlu0 %2938
    %2940 = vrot.lane.b32.xlu0 %v2882, 14
    %v2941 = vpop.permute.xlu0 %2940
    %2942 = vrot.lane.b32.xlu0 %v2887, 14
    %v2943 = vpop.permute.xlu0 %2942
    %2944 = vrot.lane.b32.xlu0 %v2892, 14
    %v2945 = vpop.permute.xlu0 %2944
    %2946 = vrot.lane.b32.xlu0 %v2897, 14
    %v2947 = vpop.permute.xlu0 %2946
    %v2964 = vadd.f32 %v449, %v2917
    %v2965 = vadd.f32 %v454, %v2919
    %v2966 = vadd.f32 %v459, %v2921
    %v2967 = vadd.f32 %v464, %v2923
    %v2968 = vadd.f32 %v469, %v2925
    %v2969 = vadd.f32 %v474, %v2927
    %v2970 = vadd.f32 %v479, %v2929
    %v2971 = vadd.f32 %v484, %v2931
    %v2972 = vadd.f32 %v489, %v2933
    %v2973 = vadd.f32 %v494, %v2935
    %v2974 = vadd.f32 %v499, %v2937
    %v2975 = vadd.f32 %v504, %v2939
    %v2976 = vadd.f32 %v509, %v2941
    %v2977 = vadd.f32 %v514, %v2943
    %v2978 = vadd.f32 %v519, %v2945
    %v2979 = vadd.f32 %v524, %v2947
    %v2980 = vtanh.pop %v2964
    %v2981 = vtanh.pop %v2965
    %v2982 = vtanh.pop %v2966
    %v2983 = vtanh.pop %v2967
    %v2984 = vtanh.pop %v2968
    %v2985 = vtanh.pop %v2969
    %v2986 = vtanh.pop %v2970
    %v2987 = vtanh.pop %v2971
    %v2988 = vtanh.pop %v2972
    %v2989 = vtanh.pop %v2973
    %v2990 = vtanh.pop %v2974
    %v2991 = vtanh.pop %v2975
    %v2992 = vtanh.pop %v2976
    %v2993 = vtanh.pop %v2977
    %v2994 = vtanh.pop %v2978
    %v2995 = vtanh.pop %v2979
    %v2996 = vmul.f32 %v2980, %v92
    %v2997 = vmul.f32 %v2981, %v93
    %v2998 = vmul.f32 %v2982, %v94
    %v2999 = vmul.f32 %v2983, %v95
    %v3000 = vmul.f32 %v2984, %v96
    %v3001 = vmul.f32 %v2985, %v97
    %v3002 = vmul.f32 %v2986, %v98
    %v3003 = vmul.f32 %v2987, %v99
    %v3004 = vmul.f32 %v2988, %v100
    %v3005 = vmul.f32 %v2989, %v101
    %v3006 = vmul.f32 %v2990, %v102
    %v3007 = vmul.f32 %v2991, %v103
    %v3008 = vmul.f32 %v2992, %v104
    %v3009 = vmul.f32 %v2993, %v105
    %v3010 = vmul.f32 %v2994, %v106
    %v3011 = vmul.f32 %v2995, %v107
    %v3012 = vadd.f32 %v2996, %v108
    %v3013 = vadd.f32 %v2997, %v109
    %v3014 = vadd.f32 %v2998, %v110
    %v3015 = vadd.f32 %v2999, %v111
    %v3016 = vadd.f32 %v3000, %v112
    %v3017 = vadd.f32 %v3001, %v113
    %v3018 = vadd.f32 %v3002, %v114
    %v3019 = vadd.f32 %v3003, %v115
    %v3020 = vadd.f32 %v3004, %v116
    %v3021 = vadd.f32 %v3005, %v117
    %v3022 = vadd.f32 %v3006, %v118
    %v3023 = vadd.f32 %v3007, %v119
    %v3024 = vadd.f32 %v3008, %v120
    %v3025 = vadd.f32 %v3009, %v121
    %v3026 = vadd.f32 %v3010, %v122
    %v3027 = vadd.f32 %v3011, %v123
    %3032 = vrot.lane.b32.xlu0 %v2727, 2
    %v3033 = vpop.permute.xlu0 %3032
    %3034 = vrot.lane.b32.xlu0 %v2728, 2
    %v3035 = vpop.permute.xlu0 %3034
    %3036 = vrot.lane.b32.xlu0 %v2729, 2
    %v3037 = vpop.permute.xlu0 %3036
    %3038 = vrot.lane.b32.xlu0 %v2730, 2
    %v3039 = vpop.permute.xlu0 %3038
    %v3044 = vmul.f32 %v3016, %v3033
    %v3045 = vmul.f32 %v3017, %v3035
    %v3046 = vmul.f32 %v3018, %v3037
    %v3047 = vmul.f32 %v3019, %v3039
    %v3048 = vmul.f32 %v3012, %v3020
    %v3049 = vmul.f32 %v3013, %v3021
    %v3050 = vmul.f32 %v3014, %v3022
    %v3051 = vmul.f32 %v3015, %v3023
    %v3052 = vadd.f32 %v3044, %v3048
    %v3053 = vadd.f32 %v3045, %v3049
    %v3054 = vadd.f32 %v3046, %v3050
    %v3055 = vadd.f32 %v3047, %v3051
    %v3056 = vtanh.pop %v3052
    %v3057 = vtanh.pop %v3053
    %v3058 = vtanh.pop %v3054
    %v3059 = vtanh.pop %v3055
    %v3060 = vmul.f32 %v3024, %v3056
    %v3061 = vmul.f32 %v3025, %v3057
    %v3062 = vmul.f32 %v3026, %v3058
    %v3063 = vmul.f32 %v3027, %v3059
    %v3064 = vld [vmem:[%s5] sm:$0xff]
    %v3065 = vld [vmem:[%s5 + $0x8] sm:$0xff]
    %v3066 = vld [vmem:[%s5 + $0x10] sm:$0xff]
    %v3067 = vld [vmem:[%s5 + $0x18] sm:$0xff]
    %v3068 = vld [vmem:[%s6] sm:$0x1]
    %v3070 = vlaneseq
    %v3071 = vshrl.u32 %v3070, 7
    %v3072 = vsub.s32 0, %v3071
    %v3073 = vrot.slane %v3068, %v3072
    %3079 = vrot.lane.b32.xlu0 %v3060, 114
    %v3080 = vpop.permute.xlu0 %3079
    %3081 = vrot.lane.b32.xlu0 %v3061, 114
    %v3082 = vpop.permute.xlu0 %3081
    %3083 = vrot.lane.b32.xlu0 %v3062, 114
    %v3084 = vpop.permute.xlu0 %3083
    %3085 = vrot.lane.b32.xlu0 %v3063, 114
    %v3086 = vpop.permute.xlu0 %3085
    %3091 = vxpose.xlu0.b32.start [1/16] %v3080, 128
    %3092 = vxpose.xlu0.b32.cont [2/16] %v3082, 128
    %3093 = vxpose.xlu0.b32.cont [3/16] %v3084, 128
    %3094 = vxpose.xlu0.b32.cont [4/16] %v3086, 128
    %3095 = vxpose.xlu0.b32.cont [5/16] 0.0, 128
    %3096 = vxpose.xlu0.b32.cont [6/16] 0.0, 128
    %3097 = vxpose.xlu0.b32.cont [7/16] 0.0, 128
    %3098 = vxpose.xlu0.b32.cont [8/16] 0.0, 128
    %3099 = vxpose.xlu0.b32.cont [9/16] 0.0, 128
    %3100 = vxpose.xlu0.b32.cont [10/16] 0.0, 128
    %3101 = vxpose.xlu0.b32.cont [11/16] 0.0, 128
    %3102 = vxpose.xlu0.b32.cont [12/16] 0.0, 128
    %3103 = vxpose.xlu0.b32.cont [13/16] 0.0, 128
    %3104 = vxpose.xlu0.b32.cont [14/16] 0.0, 128
    %3105 = vxpose.xlu0.b32.cont [15/16] 0.0, 128
    %3106 = vxpose.xlu0.b32.end [16/16] 0.0, 128
    %v3107 = vpop.trf.xlu0
    %v3108 = vpop.trf.xlu0
    %v3109 = vpop.trf.xlu0
    %v3110 = vpop.trf.xlu0
    %v3111 = vpop.trf.xlu0
    %v3112 = vpop.trf.xlu0
    %v3113 = vpop.trf.xlu0
    %v3114 = vpop.trf.xlu0
    %v3115 = vpop.trf.xlu0
    %v3116 = vpop.trf.xlu0
    %v3117 = vpop.trf.xlu0
    %v3118 = vpop.trf.xlu0
    %v3119 = vpop.trf.xlu0
    %v3120 = vpop.trf.xlu0
    %v3121 = vpop.trf.xlu0
    %v3122 = vpop.trf.xlu0
    %v3124 = vsel %vm527, %v3107, 0
    %3126 = vmatprep.subr.mxu0 0.0
    %3127 = vmatpush1.msra.mxu0 %v3064
    %3128 = vmatprep.subr.mxu0 0.0
    %3129 = vmatpush1.msra.mxu0 %v3065
    %3130 = vmatprep.subr.mxu0 0.0
    %3131 = vmatpush1.msra.mxu0 %v3066
    %3132 = vmatprep.subr.mxu0 0.0
    %3133 = vmatpush1.msra.mxu0 %v3067
    %3134 = vmatprep.subr.mxu0 0.0
    %3135 = vmatpush1.msra.mxu0 0.0
    %3136 = vmatprep.subr.mxu0 0.0
    %3137 = vmatpush1.msra.mxu0 0.0
    %3138 = vmatprep.subr.mxu0 0.0
    %3139 = vmatpush1.msra.mxu0 0.0
    %3140 = vmatprep.subr.mxu0 0.0
    %3141 = vmatpush1.msra.mxu0 0.0
    %3142 = vmatprep.subr.mxu0 0.0
    %3143 = vmatpush1.msra.mxu0 0.0
    %3144 = vmatprep.subr.mxu0 0.0
    %3145 = vmatpush1.msra.mxu0 0.0
    %3146 = vmatprep.subr.mxu0 0.0
    %3147 = vmatpush1.msra.mxu0 0.0
    %3148 = vmatprep.subr.mxu0 0.0
    %3149 = vmatpush1.msra.mxu0 0.0
    %3150 = vmatprep.subr.mxu0 0.0
    %3151 = vmatpush1.msra.mxu0 0.0
    %3152 = vmatprep.subr.mxu0 0.0
    %3153 = vmatpush1.msra.mxu0 0.0
    %3154 = vmatprep.subr.mxu0 0.0
    %3155 = vmatpush1.msra.mxu0 0.0
    %3156 = vmatprep.subr.mxu0 0.0
    %3157 = vmatpush1.msra.mxu0 0.0
    %3158 = vmatprep.subr.mxu0 0.0
    %3159 = vmatpush1.msra.mxu0 0.0
    %3160 = vmatprep.subr.mxu0 0.0
    %3161 = vmatpush1.msra.mxu0 0.0
    %3162 = vmatprep.subr.mxu0 0.0
    %3163 = vmatpush1.msra.mxu0 0.0
    %3164 = vmatprep.subr.mxu0 0.0
    %3165 = vmatpush1.msra.mxu0 0.0
    %3166 = vmatprep.subr.mxu0 0.0
    %3167 = vmatpush1.msra.mxu0 0.0
    %3168 = vmatprep.subr.mxu0 0.0
    %3169 = vmatpush1.msra.mxu0 0.0
    %3170 = vmatprep.subr.mxu0 0.0
    %3171 = vmatpush1.msra.mxu0 0.0
    %3172 = vmatprep.subr.mxu0 0.0
    %3173 = vmatpush1.msra.mxu0 0.0
    %3174 = vmatprep.subr.mxu0 0.0
    %3175 = vmatpush1.msra.mxu0 0.0
    %3176 = vmatprep.subr.mxu0 0.0
    %3177 = vmatpush1.msra.mxu0 0.0
    %3178 = vmatprep.subr.mxu0 0.0
    %3179 = vmatpush1.msra.mxu0 0.0
    %3180 = vmatprep.subr.mxu0 0.0
    %3181 = vmatpush1.msra.mxu0 0.0
    %3182 = vmatprep.subr.mxu0 0.0
    %3183 = vmatpush1.msra.mxu0 0.0
    %3184 = vmatprep.subr.mxu0 0.0
    %3185 = vmatpush1.msra.mxu0 0.0
    %3186 = vmatprep.subr.mxu0 0.0
    %3187 = vmatpush1.msra.mxu0 0.0
    %3188 = vmatprep.subr.mxu0 0.0
    %3189 = vmatpush1.msra.mxu0 0.0
    %3190 = vmatprep.mubr.f32.mxu0 0.0
    %3191 = vmatmul.mubr.f32.gmra.mrb[0].mxu0 %v3124
    %v3192 = vpop.f32.mrb[0].mxu0
    %v3193 = vadd.f32 %v3073, %v3192
    %v3194 = vpop.f32.mrb[0].mxu0
    %3195 = vdwg.mxu0
    %vm3196 = vcmask 17408
    %3197 = vst.msk [vmem:[#allocation2] sm:$0x3] %vm3196, %v3193
    // Predicated region
    $region30: #{lstm_timeseries_forward.1} parent=1 // pred_check
      _
    $region31: #{lstm_timeseries_forward.1} parent=1 // pred_check_branch
      %3199 = sbr.rel (0) target = $region33
    $region32: #{lstm_timeseries_forward.1} parent=1 // pred_region
      %s3201 = ssub.s32 32, 32
      %3202 = vsyncadd [#allocation3], %s3201
      %s3204 = sshll.u32 [#allocation2], 4
      %s3205 = int_to_ptr.vmem [resolvable:$true] %s3204
      %3207 = dma.vmem_to_hbm [thread:$0]  %s3205, 32, %s7, [#allocation3]
    $region33: #{lstm_timeseries_forward.1} parent=1 // pred_fallthru
      _
    // Predicated region
    $region34: #{lstm_timeseries_forward.1} parent=1 // pred_check
      _
    $region35: #{lstm_timeseries_forward.1} parent=1 // pred_check_branch
      %3209 = sbr.rel (0) target = $region37
    $region36: #{lstm_timeseries_forward.1} parent=1 // pred_region
      %3210 = dma.done [#allocation3], 32
    $region37: #{lstm_timeseries_forward.1} parent=1 // pred_fallthru
      _
    %3211 = vsyncpa [#allocation3], 1

</llo_original>
